<compile_context>
chip_gen: v7x
topology: tpu7x:2x2x1
jax: 0.10.0
libtpu: 0.0.40
codegen_flags: <defaults>
</compile_context>

<pallas_src>
import functools

import jax
import jax.numpy as jnp
from jax.experimental import pallas as pl
from jax.experimental.pallas import tpu as pltpu


# ---------------------------------------------------------------------------
# Phase 1: per-frame features + GRU input gates (time-parallel)
# ---------------------------------------------------------------------------
def _feature_kernel(x_ref, wc_ref, bc_ref, pool_ref, wp_ref, bp_ref,
                    wih_ref, bih_ref, gi_ref):
    # x_ref    : (1, KP, B*H*W)  im2col'd frame, contraction dim padded to 128
    # wc_ref   : (F, KP)         conv weights (im2col, transposed, K-padded)
    # bc_ref   : (F, 1)
    # pool_ref : (B*H*W, B)      block-diagonal avg-pool matrix (entries 1/(H*W))
    # wp_ref   : (HID, F), bp_ref: (HID, 1)
    # wih_ref  : (3*HID, HID), bih_ref: (3*HID, 1)
    # gi_ref   : (1, 3*HID, B)   output: GRU input-gate pre-activations at step t
    x = x_ref[0]                                                   # (KP, BHW)

    # conv3x3 'same' as a single GEMM, fused bias + ReLU; (F, BHW) is lane-dense.
    fm_t = jnp.maximum(
        jnp.dot(wc_ref[...], x, preferred_element_type=jnp.float32)
        + bc_ref[...], 0.0)                                        # (F, BHW)

    # global average pool via the MXU (no vector-unit reduction / spills).
    pooled_t = jnp.dot(fm_t, pool_ref[...],
                       preferred_element_type=jnp.float32)         # (F, B)

    # base projection to rnn_hidden_size.
    feat_t = (jnp.dot(wp_ref[...], pooled_t,
                      preferred_element_type=jnp.float32)
              + bp_ref[...])                                       # (HID, B)

    # h-independent GRU input-gate GEMM, hoisted out of the sequential phase.
    gi_t = (jnp.dot(wih_ref[...], feat_t,
                    preferred_element_type=jnp.float32)
            + bih_ref[...])                                        # (3*HID, B)
    gi_ref[0] = gi_t


# ---------------------------------------------------------------------------
# Phase 2: sequential GRU recurrence + head on the last step
# ---------------------------------------------------------------------------
def _gru_head_kernel(gi_ref, whh_ref, bhh_ref, w1_ref, b1_ref, w2_ref, b2_ref,
                     out_ref, h_ref, *, HID):
    t = pl.program_id(0)

    # init_hidden: zeros(1, B, HID) -> single-layer GRU state, kept transposed.
    @pl.when(t == 0)
    def _init():
        h_ref[...] = jnp.zeros_like(h_ref)

    gi = gi_ref[0]                                                 # (3*HID, B)
    h_prev = h_ref[...]                                            # (HID, B)
    gh = (jnp.dot(whh_ref[...], h_prev,
                  preferred_element_type=jnp.float32)
          + bhh_ref[...])                                          # (3*HID, B)

    # PyTorch nn.GRU gate equations (gates packed [r, z, n]); sublane slices.
    i_r, i_z, i_n = gi[:HID], gi[HID:2 * HID], gi[2 * HID:]
    h_r, h_z, h_n = gh[:HID], gh[HID:2 * HID], gh[2 * HID:]
    r = jax.nn.sigmoid(i_r + h_r)
    z = jax.nn.sigmoid(i_z + h_z)
    n = jnp.tanh(i_n + r * h_n)
    h_new = (1.0 - z) * n + z * h_prev
    h_ref[...] = h_new

    # head on last timestep: out[-1] -> fc1 -> dropout(id) -> fc2.
    @pl.when(t == pl.num_programs(0) - 1)
    def _head():
        o1 = (jnp.dot(w1_ref[...], h_new,
                      preferred_element_type=jnp.float32) + b1_ref[...])   # (64, B)
        out_ref[...] = (jnp.dot(w2_ref[...], o1,
                                preferred_element_type=jnp.float32)
                        + b2_ref[...])                                     # (NC, B)


# ---------------------------------------------------------------------------
# Wrapper
# ---------------------------------------------------------------------------
@jax.jit
def convrnn_forward(x, params):
    B, T, C, H, W = x.shape
    wc, bc, wp, bp, wih, whh, bih, bhh, w1, b1, w2, b2 = params
    F = wc.shape[-1]
    HID = wp.shape[-1]
    NC = w2.shape[-1]
    BHW = B * H * W
    KC = 9 * C
    KP = max(128, ((KC + 127) // 128) * 128)   # pad contraction dim to a full lane tile

    # ---- glue (XLA): NCHW -> padded im2col in a transposed, lane-dense layout ----
    xf = x.astype(jnp.float32)
    xp = jnp.pad(xf, ((0, 0), (0, 0), (0, 0), (1, 1), (1, 1)))     # (B,T,C,H+2,W+2)
    taps = [xp[:, :, :, kh:kh + H, kw:kw + W]
            for kh in range(3) for kw in range(3)]                 # 9 x (B,T,C,H,W)
    patches = jnp.stack(taps, axis=2)                              # (B,T,9,C,H,W)
    x_col = patches.transpose(1, 2, 3, 0, 4, 5).reshape(T, KC, BHW)
    x_col = jnp.pad(x_col, ((0, 0), (0, KP - KC), (0, 0)))         # (T, KP, BHW)

    # ---- transposed / padded weights (host-side, one-time) ----
    wc_t = jnp.pad(wc.reshape(KC, F).T, ((0, 0), (0, KP - KC)))    # (F, KP)
    bc_t = bc.reshape(F, 1)
    pool_t = (jnp.repeat(jnp.eye(B, dtype=jnp.float32), H * W, axis=0)
              / float(H * W))                                      # (BHW, B)
    wp_t, bp_t = wp.T, bp.reshape(HID, 1)
    wih_t, bih_t = wih.T, bih.reshape(3 * HID, 1)
    whh_t, bhh_t = whh.T, bhh.reshape(3 * HID, 1)
    w1_t, b1_t = w1.T, b1.reshape(-1, 1)
    w2_t, b2_t = w2.T, b2.reshape(NC, 1)

    def resident(a):
        nd = a.ndim
        return pl.BlockSpec(a.shape, lambda t: (0,) * nd)

    # ---- phase 1: time-parallel feature / input-gate kernel ----
    gi_all = pl.pallas_call(
        _feature_kernel,
        out_shape=jax.ShapeDtypeStruct((T, 3 * HID, B), jnp.float32),
        grid_spec=pltpu.PrefetchScalarGridSpec(
            num_scalar_prefetch=0,
            grid=(T,),
            in_specs=[pl.BlockSpec((1, KP, BHW), lambda t: (t, 0, 0)),
                      resident(wc_t), resident(bc_t), resident(pool_t),
                      resident(wp_t), resident(bp_t),
                      resident(wih_t), resident(bih_t)],
            out_specs=pl.BlockSpec((1, 3 * HID, B), lambda t: (t, 0, 0)),
        ),
        compiler_params=pltpu.CompilerParams(
            dimension_semantics=("parallel",)),    # megacore-shardable on v7x
    )(x_col, wc_t, bc_t, pool_t, wp_t, bp_t, wih_t, bih_t)

    # ---- phase 2: tiny sequential GRU recurrence + head ----
    out_t = pl.pallas_call(
        functools.partial(_gru_head_kernel, HID=HID),
        out_shape=jax.ShapeDtypeStruct((NC, B), jnp.float32),
        grid_spec=pltpu.PrefetchScalarGridSpec(
            num_scalar_prefetch=0,
            grid=(T,),
            in_specs=[pl.BlockSpec((1, 3 * HID, B), lambda t: (t, 0, 0)),
                      resident(whh_t), resident(bhh_t),
                      resident(w1_t), resident(b1_t),
                      resident(w2_t), resident(b2_t)],
            out_specs=pl.BlockSpec((NC, B), lambda t: (0, 0)),
            scratch_shapes=[pltpu.VMEM((HID, B), jnp.float32)],
        ),
        compiler_params=pltpu.CompilerParams(
            dimension_semantics=("arbitrary",)),   # true recurrence, sequential
    )(gi_all, whh_t, bhh_t, w1_t, b1_t, w2_t, b2_t)

    return out_t.T                                                 # (B, NC)


# ---------------------------------------------------------------------------
# Parameters + pure-JAX reference
# ---------------------------------------------------------------------------
def init_params(key, C, F, HID, NC):
    ks = jax.random.split(key, 12)
    s = 0.1
    wc  = s * jax.random.normal(ks[0],  (9, C, F), jnp.float32)      # conv 3x3, C->F
    bc  = s * jax.random.normal(ks[1],  (1, F), jnp.float32)
    wp  = s * jax.random.normal(ks[2],  (F, HID), jnp.float32)       # base proj -> HID
    bp  = s * jax.random.normal(ks[3],  (1, HID), jnp.float32)
    wih = s * jax.random.normal(ks[4],  (HID, 3 * HID), jnp.float32) # GRU W_ih^T
    whh = s * jax.random.normal(ks[5],  (HID, 3 * HID), jnp.float32) # GRU W_hh^T
    bih = s * jax.random.normal(ks[6],  (1, 3 * HID), jnp.float32)
    bhh = s * jax.random.normal(ks[7],  (1, 3 * HID), jnp.float32)
    w1  = s * jax.random.normal(ks[8],  (HID, 64), jnp.float32)      # fc1
    b1  = s * jax.random.normal(ks[9],  (1, 64), jnp.float32)
    w2  = s * jax.random.normal(ks[10], (64, NC), jnp.float32)       # fc2
    b2  = s * jax.random.normal(ks[11], (1, NC), jnp.float32)
    return (wc, bc, wp, bp, wih, whh, bih, bhh, w1, b1, w2, b2)


def convrnn_ref(x, params):
    """Pure-JAX reference of the same forward, for correctness checking."""
    B, T, C, H, W = x.shape
    wc, bc, wp, bp, wih, whh, bih, bhh, w1, b1, w2, b2 = params
    F, HID = wc.shape[-1], wp.shape[-1]
    x_nhwc = jnp.transpose(x, (1, 0, 3, 4, 2)).astype(jnp.float32)
    x_pad = jnp.pad(x_nhwc, ((0, 0), (0, 0), (1, 1), (1, 1), (0, 0)))
    h = jnp.zeros((B, HID), jnp.float32)
    for t in range(T):
        acc = jnp.zeros((B * H * W, F), jnp.float32)
        for kh in range(3):
            for kw in range(3):
                acc = acc + (x_pad[t][:, kh:kh + H, kw:kw + W, :]
                             .reshape(B * H * W, C) @ wc[kh * 3 + kw])
        fmap = jnp.maximum(acc + bc, 0.0)
        pooled = jnp.mean(fmap.reshape(B, H * W, F), axis=1)
        feat = pooled @ wp + bp
        gi = feat @ wih + bih
        gh = h @ whh + bhh
        r = jax.nn.sigmoid(gi[:, :HID] + gh[:, :HID])
        z = jax.nn.sigmoid(gi[:, HID:2 * HID] + gh[:, HID:2 * HID])
        n = jnp.tanh(gi[:, 2 * HID:] + r * gh[:, 2 * HID:])
        h = (1.0 - z) * n + z * h
    return (h @ w1 + b1) @ w2 + b2


if __name__ == "__main__":
    key = jax.random.PRNGKey(0)
    kx, kp = jax.random.split(key)

    # small shapes consistent with the module: batch=2, seq=8, 4x16x16 frames,
    # rnn_hidden_size=32, num_classes=8, base feature channels F=16.
    B, T, C, H, W = 2, 8, 4, 16, 16
    F, HID, NC = 16, 32, 8

    x = jax.random.normal(kx, (B, T, C, H, W), jnp.float32)
    params = init_params(kp, C, F, HID, NC)

    out = convrnn_forward(x, params)
    out = jax.block_until_ready(out)

    ref = convrnn_ref(x, params)
    assert out.shape == (B, NC)
    assert jnp.allclose(out, ref, atol=1e-3, rtol=1e-3), "mismatch vs JAX reference"
    print("KERNEL_OK")
</pallas_src>

<mosaic_0001>
module attributes {stable_mosaic.version = 11 : i64} {
  func.func @_feature_kernel(%arg0: i32, %arg1: memref<1x128x512xf32, #tpu.memory_space<vmem>>, %arg2: memref<16x128xf32, #tpu.memory_space<vmem>>, %arg3: memref<16x1xf32, #tpu.memory_space<vmem>>, %arg4: memref<512x2xf32, #tpu.memory_space<vmem>>, %arg5: memref<32x16xf32, #tpu.memory_space<vmem>>, %arg6: memref<32x1xf32, #tpu.memory_space<vmem>>, %arg7: memref<96x32xf32, #tpu.memory_space<vmem>>, %arg8: memref<96x1xf32, #tpu.memory_space<vmem>>, %arg9: memref<1x96x2xf32, #tpu.memory_space<vmem>>) attributes {dimension_semantics = [#tpu.dimension_semantics<parallel>], iteration_bounds = array<i64: 8>, scalar_prefetch = 0 : i64, scratch_operands = 0 : i64, tpu.core_type = #tpu.core_type<tc>, window_params = [{transform_indices = @transform_0, window_bounds = array<i64: 1, 128, 512>}, {pipeline_mode = #tpu.pipeline_mode<synchronous>, transform_indices = @transform_1, window_bounds = array<i64: 16, 128>}, {pipeline_mode = #tpu.pipeline_mode<synchronous>, transform_indices = @transform_2, window_bounds = array<i64: 16, 1>}, {pipeline_mode = #tpu.pipeline_mode<synchronous>, transform_indices = @transform_3, window_bounds = array<i64: 512, 2>}, {pipeline_mode = #tpu.pipeline_mode<synchronous>, transform_indices = @transform_4, window_bounds = array<i64: 32, 16>}, {pipeline_mode = #tpu.pipeline_mode<synchronous>, transform_indices = @transform_5, window_bounds = array<i64: 32, 1>}, {pipeline_mode = #tpu.pipeline_mode<synchronous>, transform_indices = @transform_6, window_bounds = array<i64: 96, 32>}, {pipeline_mode = #tpu.pipeline_mode<synchronous>, transform_indices = @transform_7, window_bounds = array<i64: 96, 1>}, {transform_indices = @transform_8, window_bounds = array<i64: 1, 96, 2>}]} {
    %c0 = arith.constant 0 : index
    %c0_0 = arith.constant 0 : index
    %c0_1 = arith.constant 0 : index
    %0 = vector.load %arg1[%c0, %c0_0, %c0_1] : memref<1x128x512xf32, #tpu.memory_space<vmem>>, vector<1x128x512xf32>
    %1 = vector.shape_cast %0 : vector<1x128x512xf32> to vector<128x512xf32>
    %c0_2 = arith.constant 0 : index
    %c0_3 = arith.constant 0 : index
    %2 = vector.load %arg2[%c0_2, %c0_3] : memref<16x128xf32, #tpu.memory_space<vmem>>, vector<16x128xf32>
    %cst = arith.constant dense<0.000000e+00> : vector<16x512xf32>
    %3 = tpu.matmul %2, %1, %cst {dimension_numbers = #tpu.dot_dimension_numbers<[1], [0], [0], [1], [0, 0, 1, 1], [], []>} : vector<16x128xf32>, vector<128x512xf32>, vector<16x512xf32> -> vector<16x512xf32>
    %c0_4 = arith.constant 0 : index
    %c0_5 = arith.constant 0 : index
    %4 = vector.load %arg3[%c0_4, %c0_5] : memref<16x1xf32, #tpu.memory_space<vmem>>, vector<16x1xf32>
    %5 = vector.broadcast %4 : vector<16x1xf32> to vector<16x512xf32>
    %6 = arith.addf %3, %5 : vector<16x512xf32>
    %cst_6 = arith.constant 0.000000e+00 : f32
    %7 = vector.broadcast %cst_6 : f32 to vector<16x512xf32>
    %8 = arith.maximumf %6, %7 : vector<16x512xf32>
    %c0_7 = arith.constant 0 : index
    %c0_8 = arith.constant 0 : index
    %9 = vector.load %arg4[%c0_7, %c0_8] : memref<512x2xf32, #tpu.memory_space<vmem>>, vector<512x2xf32>
    %cst_9 = arith.constant dense<0.000000e+00> : vector<16x2xf32>
    %10 = tpu.matmul %8, %9, %cst_9 {dimension_numbers = #tpu.dot_dimension_numbers<[1], [0], [0], [1], [0, 0, 1, 1], [], []>} : vector<16x512xf32>, vector<512x2xf32>, vector<16x2xf32> -> vector<16x2xf32>
    %c0_10 = arith.constant 0 : index
    %c0_11 = arith.constant 0 : index
    %11 = vector.load %arg5[%c0_10, %c0_11] : memref<32x16xf32, #tpu.memory_space<vmem>>, vector<32x16xf32>
    %cst_12 = arith.constant dense<0.000000e+00> : vector<32x2xf32>
    %12 = tpu.matmul %11, %10, %cst_12 {dimension_numbers = #tpu.dot_dimension_numbers<[1], [0], [0], [1], [0, 0, 1, 1], [], []>} : vector<32x16xf32>, vector<16x2xf32>, vector<32x2xf32> -> vector<32x2xf32>
    %c0_13 = arith.constant 0 : index
    %c0_14 = arith.constant 0 : index
    %13 = vector.load %arg6[%c0_13, %c0_14] : memref<32x1xf32, #tpu.memory_space<vmem>>, vector<32x1xf32>
    %14 = vector.broadcast %13 : vector<32x1xf32> to vector<32x2xf32>
    %15 = arith.addf %12, %14 : vector<32x2xf32>
    %c0_15 = arith.constant 0 : index
    %c0_16 = arith.constant 0 : index
    %16 = vector.load %arg7[%c0_15, %c0_16] : memref<96x32xf32, #tpu.memory_space<vmem>>, vector<96x32xf32>
    %cst_17 = arith.constant dense<0.000000e+00> : vector<96x2xf32>
    %17 = tpu.matmul %16, %15, %cst_17 {dimension_numbers = #tpu.dot_dimension_numbers<[1], [0], [0], [1], [0, 0, 1, 1], [], []>} : vector<96x32xf32>, vector<32x2xf32>, vector<96x2xf32> -> vector<96x2xf32>
    %c0_18 = arith.constant 0 : index
    %c0_19 = arith.constant 0 : index
    %18 = vector.load %arg8[%c0_18, %c0_19] : memref<96x1xf32, #tpu.memory_space<vmem>>, vector<96x1xf32>
    %19 = vector.broadcast %18 : vector<96x1xf32> to vector<96x2xf32>
    %20 = arith.addf %17, %19 : vector<96x2xf32>
    %c0_20 = arith.constant 0 : index
    %c0_21 = arith.constant 0 : index
    %c0_22 = arith.constant 0 : index
    %21 = vector.load %arg9[%c0_20, %c0_21, %c0_22] : memref<1x96x2xf32, #tpu.memory_space<vmem>>, vector<1x96x2xf32>
    %22 = vector.shape_cast %21 : vector<1x96x2xf32> to vector<96x2xf32>
    %23 = vector.shape_cast %20 : vector<96x2xf32> to vector<1x96x2xf32>
    tpu.vector_store %arg9[%c0_20, %c0_21, %c0_22], %23 {strides = array<i32>} : memref<1x96x2xf32, #tpu.memory_space<vmem>>, vector<1x96x2xf32>,
    return
  }
  func.func @transform_0(%arg0: i32) -> (i32, i32, i32) {
    %c0_i32 = arith.constant 0 : i32
    %c0_i32_0 = arith.constant 0 : i32
    %c0_i32_1 = arith.constant 0 : i32
    return %arg0, %c0_i32, %c0_i32_0 : i32, i32, i32
  }
  func.func @transform_1(%arg0: i32) -> (i32, i32) {
    %c0_i32 = arith.constant 0 : i32
    %c0_i32_0 = arith.constant 0 : i32
    %c0_i32_1 = arith.constant 0 : i32
    return %c0_i32, %c0_i32_0 : i32, i32
  }
  func.func @transform_2(%arg0: i32) -> (i32, i32) {
    %c0_i32 = arith.constant 0 : i32
    %c0_i32_0 = arith.constant 0 : i32
    %c0_i32_1 = arith.constant 0 : i32
    return %c0_i32, %c0_i32_0 : i32, i32
  }
  func.func @transform_3(%arg0: i32) -> (i32, i32) {
    %c0_i32 = arith.constant 0 : i32
    %c0_i32_0 = arith.constant 0 : i32
    %c0_i32_1 = arith.constant 0 : i32
    return %c0_i32, %c0_i32_0 : i32, i32
  }
  func.func @transform_4(%arg0: i32) -> (i32, i32) {
    %c0_i32 = arith.constant 0 : i32
    %c0_i32_0 = arith.constant 0 : i32
    %c0_i32_1 = arith.constant 0 : i32
    return %c0_i32, %c0_i32_0 : i32, i32
  }
  func.func @transform_5(%arg0: i32) -> (i32, i32) {
    %c0_i32 = arith.constant 0 : i32
    %c0_i32_0 = arith.constant 0 : i32
    %c0_i32_1 = arith.constant 0 : i32
    return %c0_i32, %c0_i32_0 : i32, i32
  }
  func.func @transform_6(%arg0: i32) -> (i32, i32) {
    %c0_i32 = arith.constant 0 : i32
    %c0_i32_0 = arith.constant 0 : i32
    %c0_i32_1 = arith.constant 0 : i32
    return %c0_i32, %c0_i32_0 : i32, i32
  }
  func.func @transform_7(%arg0: i32) -> (i32, i32) {
    %c0_i32 = arith.constant 0 : i32
    %c0_i32_0 = arith.constant 0 : i32
    %c0_i32_1 = arith.constant 0 : i32
    return %c0_i32, %c0_i32_0 : i32, i32
  }
  func.func @transform_8(%arg0: i32) -> (i32, i32, i32) {
    %c0_i32 = arith.constant 0 : i32
    %c0_i32_0 = arith.constant 0 : i32
    %c0_i32_1 = arith.constant 0 : i32
    return %arg0, %c0_i32, %c0_i32_0 : i32, i32, i32
  }
}

module attributes {stable_mosaic.version = 11 : i64} {
  func.func @_gru_head_kernel(%arg0: i32, %arg1: memref<1x96x2xf32, #tpu.memory_space<vmem>>, %arg2: memref<96x32xf32, #tpu.memory_space<vmem>>, %arg3: memref<96x1xf32, #tpu.memory_space<vmem>>, %arg4: memref<64x32xf32, #tpu.memory_space<vmem>>, %arg5: memref<64x1xf32, #tpu.memory_space<vmem>>, %arg6: memref<8x64xf32, #tpu.memory_space<vmem>>, %arg7: memref<8x1xf32, #tpu.memory_space<vmem>>, %arg8: memref<8x2xf32, #tpu.memory_space<vmem>>, %arg9: memref<32x2xf32, #tpu.memory_space<vmem>>) attributes {dimension_semantics = [#tpu.dimension_semantics<arbitrary>], iteration_bounds = array<i64: 8>, scalar_prefetch = 0 : i64, scratch_operands = 1 : i64, tpu.core_type = #tpu.core_type<tc>, window_params = [{transform_indices = @transform_0, window_bounds = array<i64: 1, 96, 2>}, {pipeline_mode = #tpu.pipeline_mode<synchronous>, transform_indices = @transform_1, window_bounds = array<i64: 96, 32>}, {pipeline_mode = #tpu.pipeline_mode<synchronous>, transform_indices = @transform_2, window_bounds = array<i64: 96, 1>}, {pipeline_mode = #tpu.pipeline_mode<synchronous>, transform_indices = @transform_3, window_bounds = array<i64: 64, 32>}, {pipeline_mode = #tpu.pipeline_mode<synchronous>, transform_indices = @transform_4, window_bounds = array<i64: 64, 1>}, {pipeline_mode = #tpu.pipeline_mode<synchronous>, transform_indices = @transform_5, window_bounds = array<i64: 8, 64>}, {pipeline_mode = #tpu.pipeline_mode<synchronous>, transform_indices = @transform_6, window_bounds = array<i64: 8, 1>}, {pipeline_mode = #tpu.pipeline_mode<synchronous>, transform_indices = @transform_7, window_bounds = array<i64: 8, 2>}]} {
    %c0_i32 = arith.constant 0 : i32
    %0 = arith.cmpi eq, %arg0, %c0_i32 : i32
    %1 = arith.extui %0 : i1 to i32
    %c0_i32_0 = arith.constant 0 : i32
    %2 = arith.cmpi ne, %1, %c0_i32_0 : i32
    scf.if %2 {
      %cst_15 = arith.constant 0.000000e+00 : f32
      %41 = vector.broadcast %cst_15 : f32 to vector<32x2xf32>
      %c0_16 = arith.constant 0 : index
      %c0_17 = arith.constant 0 : index
      %42 = vector.load %arg9[%c0_16, %c0_17] : memref<32x2xf32, #tpu.memory_space<vmem>>, vector<32x2xf32>
      tpu.vector_store %arg9[%c0_16, %c0_17], %41 {strides = array<i32>} : memref<32x2xf32, #tpu.memory_space<vmem>>, vector<32x2xf32>,
    } else {
    }
    %c0 = arith.constant 0 : index
    %c0_1 = arith.constant 0 : index
    %c0_2 = arith.constant 0 : index
    %3 = vector.load %arg1[%c0, %c0_1, %c0_2] : memref<1x96x2xf32, #tpu.memory_space<vmem>>, vector<1x96x2xf32>
    %4 = vector.shape_cast %3 : vector<1x96x2xf32> to vector<96x2xf32>
    %c0_3 = arith.constant 0 : index
    %c0_4 = arith.constant 0 : index
    %5 = vector.load %arg9[%c0_3, %c0_4] : memref<32x2xf32, #tpu.memory_space<vmem>>, vector<32x2xf32>
    %c0_5 = arith.constant 0 : index
    %c0_6 = arith.constant 0 : index
    %6 = vector.load %arg2[%c0_5, %c0_6] : memref<96x32xf32, #tpu.memory_space<vmem>>, vector<96x32xf32>
    %cst = arith.constant dense<0.000000e+00> : vector<96x2xf32>
    %7 = tpu.matmul %6, %5, %cst {dimension_numbers = #tpu.dot_dimension_numbers<[1], [0], [0], [1], [0, 0, 1, 1], [], []>} : vector<96x32xf32>, vector<32x2xf32>, vector<96x2xf32> -> vector<96x2xf32>
    %c0_7 = arith.constant 0 : index
    %c0_8 = arith.constant 0 : index
    %8 = vector.load %arg3[%c0_7, %c0_8] : memref<96x1xf32, #tpu.memory_space<vmem>>, vector<96x1xf32>
    %9 = vector.broadcast %8 : vector<96x1xf32> to vector<96x2xf32>
    %10 = arith.addf %7, %9 : vector<96x2xf32>
    %11 = vector.extract_strided_slice %4 {offsets = [0, 0], sizes = [32, 2], strides = [1, 1]} : vector<96x2xf32> to vector<32x2xf32>
    %12 = vector.extract_strided_slice %4 {offsets = [32, 0], sizes = [32, 2], strides = [1, 1]} : vector<96x2xf32> to vector<32x2xf32>
    %13 = vector.extract_strided_slice %4 {offsets = [64, 0], sizes = [32, 2], strides = [1, 1]} : vector<96x2xf32> to vector<32x2xf32>
    %14 = vector.extract_strided_slice %10 {offsets = [0, 0], sizes = [32, 2], strides = [1, 1]} : vector<96x2xf32> to vector<32x2xf32>
    %15 = vector.extract_strided_slice %10 {offsets = [32, 0], sizes = [32, 2], strides = [1, 1]} : vector<96x2xf32> to vector<32x2xf32>
    %16 = vector.extract_strided_slice %10 {offsets = [64, 0], sizes = [32, 2], strides = [1, 1]} : vector<96x2xf32> to vector<32x2xf32>
    %17 = arith.addf %11, %14 : vector<32x2xf32>
    %18 = arith.negf %17 : vector<32x2xf32>
    %19 = math.exp %18 : vector<32x2xf32>
    %cst_9 = arith.constant 1.000000e+00 : f32
    %20 = vector.broadcast %cst_9 : f32 to vector<32x2xf32>
    %21 = arith.addf %20, %19 : vector<32x2xf32>
    %22 = arith.divf %20, %21 : vector<32x2xf32>
    %23 = arith.addf %12, %15 : vector<32x2xf32>
    %24 = arith.negf %23 : vector<32x2xf32>
    %25 = math.exp %24 : vector<32x2xf32>
    %cst_10 = arith.constant 1.000000e+00 : f32
    %26 = vector.broadcast %cst_10 : f32 to vector<32x2xf32>
    %27 = arith.addf %26, %25 : vector<32x2xf32>
    %28 = arith.divf %26, %27 : vector<32x2xf32>
    %29 = arith.mulf %22, %16 : vector<32x2xf32>
    %30 = arith.addf %13, %29 : vector<32x2xf32>
    %31 = math.tanh %30 : vector<32x2xf32>
    %cst_11 = arith.constant 1.000000e+00 : f32
    %32 = vector.broadcast %cst_11 : f32 to vector<32x2xf32>
    %33 = arith.subf %32, %28 : vector<32x2xf32>
    %34 = arith.mulf %33, %31 : vector<32x2xf32>
    %35 = arith.mulf %28, %5 : vector<32x2xf32>
    %36 = arith.addf %34, %35 : vector<32x2xf32>
    %c0_12 = arith.constant 0 : index
    %c0_13 = arith.constant 0 : index
    %37 = vector.load %arg9[%c0_12, %c0_13] : memref<32x2xf32, #tpu.memory_space<vmem>>, vector<32x2xf32>
    tpu.vector_store %arg9[%c0_12, %c0_13], %36 {strides = array<i32>} : memref<32x2xf32, #tpu.memory_space<vmem>>, vector<32x2xf32>,
    %c7_i32 = arith.constant 7 : i32
    %38 = arith.cmpi eq, %arg0, %c7_i32 : i32
    %39 = arith.extui %38 : i1 to i32
    %c0_i32_14 = arith.constant 0 : i32
    %40 = arith.cmpi ne, %39, %c0_i32_14 : i32
    scf.if %40 {
      %c0_15 = arith.constant 0 : index
      %c0_16 = arith.constant 0 : index
      %41 = vector.load %arg4[%c0_15, %c0_16] : memref<64x32xf32, #tpu.memory_space<vmem>>, vector<64x32xf32>
      %cst_17 = arith.constant dense<0.000000e+00> : vector<64x2xf32>
      %42 = tpu.matmul %41, %36, %cst_17 {dimension_numbers = #tpu.dot_dimension_numbers<[1], [0], [0], [1], [0, 0, 1, 1], [], []>} : vector<64x32xf32>, vector<32x2xf32>, vector<64x2xf32> -> vector<64x2xf32>
      %c0_18 = arith.constant 0 : index
      %c0_19 = arith.constant 0 : index
      %43 = vector.load %arg5[%c0_18, %c0_19] : memref<64x1xf32, #tpu.memory_space<vmem>>, vector<64x1xf32>
      %44 = vector.broadcast %43 : vector<64x1xf32> to vector<64x2xf32>
      %45 = arith.addf %42, %44 : vector<64x2xf32>
      %c0_20 = arith.constant 0 : index
      %c0_21 = arith.constant 0 : index
      %46 = vector.load %arg6[%c0_20, %c0_21] : memref<8x64xf32, #tpu.memory_space<vmem>>, vector<8x64xf32>
      %cst_22 = arith.constant dense<0.000000e+00> : vector<8x2xf32>
      %47 = tpu.matmul %46, %45, %cst_22 {dimension_numbers = #tpu.dot_dimension_numbers<[1], [0], [0], [1], [0, 0, 1, 1], [], []>} : vector<8x64xf32>, vector<64x2xf32>, vector<8x2xf32> -> vector<8x2xf32>
      %c0_23 = arith.constant 0 : index
      %c0_24 = arith.constant 0 : index
      %48 = vector.load %arg7[%c0_23, %c0_24] : memref<8x1xf32, #tpu.memory_space<vmem>>, vector<8x1xf32>
      %49 = vector.broadcast %48 : vector<8x1xf32> to vector<8x2xf32>
      %50 = arith.addf %47, %49 : vector<8x2xf32>
      %c0_25 = arith.constant 0 : index
      %c0_26 = arith.constant 0 : index
      %51 = vector.load %arg8[%c0_25, %c0_26] : memref<8x2xf32, #tpu.memory_space<vmem>>, vector<8x2xf32>
      tpu.vector_store %arg8[%c0_25, %c0_26], %50 {strides = array<i32>} : memref<8x2xf32, #tpu.memory_space<vmem>>, vector<8x2xf32>,
    } else {
    }
    return
  }
  func.func @transform_0(%arg0: i32) -> (i32, i32, i32) {
    %c0_i32 = arith.constant 0 : i32
    %c0_i32_0 = arith.constant 0 : i32
    %c0_i32_1 = arith.constant 0 : i32
    return %arg0, %c0_i32, %c0_i32_0 : i32, i32, i32
  }
  func.func @transform_1(%arg0: i32) -> (i32, i32) {
    %c0_i32 = arith.constant 0 : i32
    %c0_i32_0 = arith.constant 0 : i32
    %c0_i32_1 = arith.constant 0 : i32
    return %c0_i32, %c0_i32_0 : i32, i32
  }
  func.func @transform_2(%arg0: i32) -> (i32, i32) {
    %c0_i32 = arith.constant 0 : i32
    %c0_i32_0 = arith.constant 0 : i32
    %c0_i32_1 = arith.constant 0 : i32
    return %c0_i32, %c0_i32_0 : i32, i32
  }
  func.func @transform_3(%arg0: i32) -> (i32, i32) {
    %c0_i32 = arith.constant 0 : i32
    %c0_i32_0 = arith.constant 0 : i32
    %c0_i32_1 = arith.constant 0 : i32
    return %c0_i32, %c0_i32_0 : i32, i32
  }
  func.func @transform_4(%arg0: i32) -> (i32, i32) {
    %c0_i32 = arith.constant 0 : i32
    %c0_i32_0 = arith.constant 0 : i32
    %c0_i32_1 = arith.constant 0 : i32
    return %c0_i32, %c0_i32_0 : i32, i32
  }
  func.func @transform_5(%arg0: i32) -> (i32, i32) {
    %c0_i32 = arith.constant 0 : i32
    %c0_i32_0 = arith.constant 0 : i32
    %c0_i32_1 = arith.constant 0 : i32
    return %c0_i32, %c0_i32_0 : i32, i32
  }
  func.func @transform_6(%arg0: i32) -> (i32, i32) {
    %c0_i32 = arith.constant 0 : i32
    %c0_i32_0 = arith.constant 0 : i32
    %c0_i32_1 = arith.constant 0 : i32
    return %c0_i32, %c0_i32_0 : i32, i32
  }
  func.func @transform_7(%arg0: i32) -> (i32, i32) {
    %c0_i32 = arith.constant 0 : i32
    %c0_i32_0 = arith.constant 0 : i32
    %c0_i32_1 = arith.constant 0 : i32
    return %c0_i32, %c0_i32_0 : i32, i32
  }
}

</mosaic_0001>

<llo_original>
// kernel: convrnn_forward.3
$region0: #{convrnn_forward.3}
  #allocation0 [shape = 'u32[]', space=smem, size = 0x4, offset = 0x4, fixed_abs, tag = 'smem constant byte address 0x4 - core index']
  #allocation1 [shape = 'u32[144,128]{1,0:T(1,128)}', space=vmem, size = 0x12000, scoped, tag = 'internal scratch']
  #allocation2 [shape = 'f32[32,2]{1,0:T(8,128)}', space=vmem, size = 0x4000, scoped, tag = 'scratch operand']
  %s0 = inlined_call_operand.vmem [shape: f32[8,96,2], index: 0, kind: input, shape index: {}]
  %s1 = inlined_call_operand.vmem [shape: f32[96,32], index: 1, kind: input, shape index: {}]
  %s2 = inlined_call_operand.vmem [shape: f32[96,1], index: 2, kind: input, shape index: {}]
  %s3 = inlined_call_operand.vmem [shape: f32[64,32], index: 3, kind: input, shape index: {}]
  %s4 = inlined_call_operand.vmem [shape: f32[64,1], index: 4, kind: input, shape index: {}]
  %s5 = inlined_call_operand.vmem [shape: f32[8,64], index: 5, kind: input, shape index: {}]
  %s6 = inlined_call_operand.vmem [shape: f32[8,1], index: 6, kind: input, shape index: {}]
  %s7 = inlined_call_operand.vmem [shape: f32[8,2], index: 7, kind: output, shape index: {}]
  %s8 = sld [smem:[#allocation0]]
  $region69: #{convrnn_forward.3} parent=0
    _
  %s10 = ssub.s32 1, %s8
  %s11 = scalar_select 0, %s10, %s8
  loop: start=0, step=1, limit=10
  $region2: #{convrnn_forward.3} parent=0 // loop_pre_header
    _
  $region3: #{convrnn_forward.3} parent=0 // loop_header
    %s13 = sphi 0, %s17
    %p14 = scmp.ge.s32.totalorder %s13, 10
    %s23 = sphi 0, %s25
    %s26 = sphi 0, %s23
    %s27 = sphi 0, %s26
    %s43 = sphi 0, %s27
    %s47 = sphi 0, %s47
    %s49 = sphi 0, %s47
    %s50 = sphi 0, %s49
    %s64 = sphi 0, %s50
    %s68 = sphi 0, %s68
    %s70 = sphi 0, %s68
    %s71 = sphi 0, %s70
    %s85 = sphi 0, %s71
    %s89 = sphi 0, %s89
    %s91 = sphi 0, %s89
    %s92 = sphi 0, %s91
    %s106 = sphi 0, %s92
    %s110 = sphi 0, %s110
    %s112 = sphi 0, %s110
    %s113 = sphi 0, %s112
    %s127 = sphi 0, %s113
    %s131 = sphi 0, %s131
    %s133 = sphi 0, %s131
    %s134 = sphi 0, %s133
    %s148 = sphi 0, %s134
    %s152 = sphi 0, %s152
    %s154 = sphi 0, %s152
    %s155 = sphi 0, %s154
    %s169 = sphi 0, %s155
    %s173 = sphi 0, %s173
    %s175 = sphi 0, %s173
    %s176 = sphi 0, %s175
    %s190 = sphi 0, %s176
  $region4: #{convrnn_forward.3} parent=0 // loop_header_branch
    %16 = sbr.rel (%p14) target = $region8
  $region5: #{convrnn_forward.3} parent=0 // loop_body
    %s18 = ssub.s32 %s13, 1
    %s19 = ssub.s32 %s13, 2
    %s20 = sadd.s32 %s13, 1
    %s21 = ssub.s32 %s13, %s20
    %p22 = scmp.eq.s32.totalorder %s21, 0
    %s24 = sadd.s32 %s23, 1
    %s25 = scalar_select %p22, %s23, %s24
    %p28 = pneg %p22
    %p29 = scmp.eq.s32.totalorder %s13, 7
    %p30 = por %p28, %p29
    %p31 = scmp.ne.s32.totalorder %s23, %s26
    %p32 = scmp.eq.s32.totalorder %s13, 0
    %p33 = por %p31, %p32
    %p34 = scmp.ne.s32.totalorder %s23, %s26
    %p35 = scmp.eq.s32.totalorder %s18, 7
    %p36 = por %p34, %p35
    %p37 = scmp.ne.s32.totalorder %s26, %s27
    %p38 = scmp.eq.s32.totalorder %s18, 0
    %p39 = por %p37, %p38
    %p40 = scmp.ne.s32.totalorder %s26, %s27
    %p41 = scmp.eq.s32.totalorder %s19, 7
    %p42 = por %p40, %p41
    %p44 = scmp.ne.s32.totalorder %s27, %s43
    %p45 = scmp.eq.s32.totalorder %s19, 0
    %p46 = por %p44, %p45
    %s48 = sadd.s32 %s47, 1
    %p51 = scmp.eq.s32.totalorder %s13, 7
    %p52 = scmp.ne.s32.totalorder %s47, %s49
    %p53 = scmp.eq.s32.totalorder %s13, 0
    %p54 = por %p52, %p53
    %p55 = scmp.ne.s32.totalorder %s47, %s49
    %p56 = scmp.eq.s32.totalorder %s18, 7
    %p57 = por %p55, %p56
    %p58 = scmp.ne.s32.totalorder %s49, %s50
    %p59 = scmp.eq.s32.totalorder %s18, 0
    %p60 = por %p58, %p59
    %p61 = scmp.ne.s32.totalorder %s49, %s50
    %p62 = scmp.eq.s32.totalorder %s19, 7
    %p63 = por %p61, %p62
    %p65 = scmp.ne.s32.totalorder %s50, %s64
    %p66 = scmp.eq.s32.totalorder %s19, 0
    %p67 = por %p65, %p66
    %s69 = sadd.s32 %s68, 1
    %p72 = scmp.eq.s32.totalorder %s13, 7
    %p73 = scmp.ne.s32.totalorder %s68, %s70
    %p74 = scmp.eq.s32.totalorder %s13, 0
    %p75 = por %p73, %p74
    %p76 = scmp.ne.s32.totalorder %s68, %s70
    %p77 = scmp.eq.s32.totalorder %s18, 7
    %p78 = por %p76, %p77
    %p79 = scmp.ne.s32.totalorder %s70, %s71
    %p80 = scmp.eq.s32.totalorder %s18, 0
    %p81 = por %p79, %p80
    %p82 = scmp.ne.s32.totalorder %s70, %s71
    %p83 = scmp.eq.s32.totalorder %s19, 7
    %p84 = por %p82, %p83
    %p86 = scmp.ne.s32.totalorder %s71, %s85
    %p87 = scmp.eq.s32.totalorder %s19, 0
    %p88 = por %p86, %p87
    %s90 = sadd.s32 %s89, 1
    %p93 = scmp.eq.s32.totalorder %s13, 7
    %p94 = scmp.ne.s32.totalorder %s89, %s91
    %p95 = scmp.eq.s32.totalorder %s13, 0
    %p96 = por %p94, %p95
    %p97 = scmp.ne.s32.totalorder %s89, %s91
    %p98 = scmp.eq.s32.totalorder %s18, 7
    %p99 = por %p97, %p98
    %p100 = scmp.ne.s32.totalorder %s91, %s92
    %p101 = scmp.eq.s32.totalorder %s18, 0
    %p102 = por %p100, %p101
    %p103 = scmp.ne.s32.totalorder %s91, %s92
    %p104 = scmp.eq.s32.totalorder %s19, 7
    %p105 = por %p103, %p104
    %p107 = scmp.ne.s32.totalorder %s92, %s106
    %p108 = scmp.eq.s32.totalorder %s19, 0
    %p109 = por %p107, %p108
    %s111 = sadd.s32 %s110, 1
    %p114 = scmp.eq.s32.totalorder %s13, 7
    %p115 = scmp.ne.s32.totalorder %s110, %s112
    %p116 = scmp.eq.s32.totalorder %s13, 0
    %p117 = por %p115, %p116
    %p118 = scmp.ne.s32.totalorder %s110, %s112
    %p119 = scmp.eq.s32.totalorder %s18, 7
    %p120 = por %p118, %p119
    %p121 = scmp.ne.s32.totalorder %s112, %s113
    %p122 = scmp.eq.s32.totalorder %s18, 0
    %p123 = por %p121, %p122
    %p124 = scmp.ne.s32.totalorder %s112, %s113
    %p125 = scmp.eq.s32.totalorder %s19, 7
    %p126 = por %p124, %p125
    %p128 = scmp.ne.s32.totalorder %s113, %s127
    %p129 = scmp.eq.s32.totalorder %s19, 0
    %p130 = por %p128, %p129
    %s132 = sadd.s32 %s131, 1
    %p135 = scmp.eq.s32.totalorder %s13, 7
    %p136 = scmp.ne.s32.totalorder %s131, %s133
    %p137 = scmp.eq.s32.totalorder %s13, 0
    %p138 = por %p136, %p137
    %p139 = scmp.ne.s32.totalorder %s131, %s133
    %p140 = scmp.eq.s32.totalorder %s18, 7
    %p141 = por %p139, %p140
    %p142 = scmp.ne.s32.totalorder %s133, %s134
    %p143 = scmp.eq.s32.totalorder %s18, 0
    %p144 = por %p142, %p143
    %p145 = scmp.ne.s32.totalorder %s133, %s134
    %p146 = scmp.eq.s32.totalorder %s19, 7
    %p147 = por %p145, %p146
    %p149 = scmp.ne.s32.totalorder %s134, %s148
    %p150 = scmp.eq.s32.totalorder %s19, 0
    %p151 = por %p149, %p150
    %s153 = sadd.s32 %s152, 1
    %p156 = scmp.eq.s32.totalorder %s13, 7
    %p157 = scmp.ne.s32.totalorder %s152, %s154
    %p158 = scmp.eq.s32.totalorder %s13, 0
    %p159 = por %p157, %p158
    %p160 = scmp.ne.s32.totalorder %s152, %s154
    %p161 = scmp.eq.s32.totalorder %s18, 7
    %p162 = por %p160, %p161
    %p163 = scmp.ne.s32.totalorder %s154, %s155
    %p164 = scmp.eq.s32.totalorder %s18, 0
    %p165 = por %p163, %p164
    %p166 = scmp.ne.s32.totalorder %s154, %s155
    %p167 = scmp.eq.s32.totalorder %s19, 7
    %p168 = por %p166, %p167
    %p170 = scmp.ne.s32.totalorder %s155, %s169
    %p171 = scmp.eq.s32.totalorder %s19, 0
    %p172 = por %p170, %p171
    %s174 = sadd.s32 %s173, 1
    %p177 = scmp.eq.s32.totalorder %s13, 7
    %p178 = scmp.ne.s32.totalorder %s173, %s175
    %p179 = scmp.eq.s32.totalorder %s13, 0
    %p180 = por %p178, %p179
    %p181 = scmp.ne.s32.totalorder %s173, %s175
    %p182 = scmp.eq.s32.totalorder %s18, 7
    %p183 = por %p181, %p182
    %p184 = scmp.ne.s32.totalorder %s175, %s176
    %p185 = scmp.eq.s32.totalorder %s18, 0
    %p186 = por %p184, %p185
    %p187 = scmp.ne.s32.totalorder %s175, %s176
    %p188 = scmp.eq.s32.totalorder %s19, 7
    %p189 = por %p187, %p188
    %p191 = scmp.ne.s32.totalorder %s176, %s190
    %p192 = scmp.eq.s32.totalorder %s19, 0
    %p193 = por %p191, %p192
    %p194 = scmp.le.s32.totalorder 1, %s13
    %p195 = scmp.lt.s32.totalorder %s13, 9
    %p196 = pnand %p194, %p195
    %p197 = pneg %p196
    // Predicated region
    $region9: #{convrnn_forward.3} parent=5 // pred_check
      _
    $region10: #{convrnn_forward.3} parent=5 // pred_check_branch
      %199 = sbr.rel (%p196) target = $region12
    $region11: #{convrnn_forward.3} parent=5 // pred_region
      %s200 = ssub.s32 %s13, 1
      // Predicated region
      $region13: #{convrnn_forward.3} parent=11 // pred_check
        %p201 = pneg %p60
      $region14: #{convrnn_forward.3} parent=11 // pred_check_branch
        %203 = sbr.rel (%p201) target = $region16
      $region15: #{convrnn_forward.3} parent=11 // pred_region
        _
      $region16: #{convrnn_forward.3} parent=11 // pred_fallthru
        _
      // Predicated region
      $region17: #{convrnn_forward.3} parent=11 // pred_check
        %p204 = pneg %p81
      $region18: #{convrnn_forward.3} parent=11 // pred_check_branch
        %206 = sbr.rel (%p204) target = $region20
      $region19: #{convrnn_forward.3} parent=11 // pred_region
        _
      $region20: #{convrnn_forward.3} parent=11 // pred_fallthru
        _
      // Predicated region
      $region21: #{convrnn_forward.3} parent=11 // pred_check
        %p207 = pneg %p102
      $region22: #{convrnn_forward.3} parent=11 // pred_check_branch
        %209 = sbr.rel (%p207) target = $region24
      $region23: #{convrnn_forward.3} parent=11 // pred_region
        _
      $region24: #{convrnn_forward.3} parent=11 // pred_fallthru
        _
      // Predicated region
      $region25: #{convrnn_forward.3} parent=11 // pred_check
        %p210 = pneg %p123
      $region26: #{convrnn_forward.3} parent=11 // pred_check_branch
        %212 = sbr.rel (%p210) target = $region28
      $region27: #{convrnn_forward.3} parent=11 // pred_region
        _
      $region28: #{convrnn_forward.3} parent=11 // pred_fallthru
        _
      // Predicated region
      $region29: #{convrnn_forward.3} parent=11 // pred_check
        %p213 = pneg %p144
      $region30: #{convrnn_forward.3} parent=11 // pred_check_branch
        %215 = sbr.rel (%p213) target = $region32
      $region31: #{convrnn_forward.3} parent=11 // pred_region
        _
      $region32: #{convrnn_forward.3} parent=11 // pred_fallthru
        _
      // Predicated region
      $region33: #{convrnn_forward.3} parent=11 // pred_check
        %p216 = pneg %p165
      $region34: #{convrnn_forward.3} parent=11 // pred_check_branch
        %218 = sbr.rel (%p216) target = $region36
      $region35: #{convrnn_forward.3} parent=11 // pred_region
        _
      $region36: #{convrnn_forward.3} parent=11 // pred_fallthru
        _
    $region12: #{convrnn_forward.3} parent=5 // pred_fallthru
      _
    %p219 = scmp.lt.s32.totalorder %s13, 8
    // Predicated region
    $region37: #{convrnn_forward.3} parent=5 // pred_check
      %p220 = pneg %p219
    $region38: #{convrnn_forward.3} parent=5 // pred_check_branch
      %222 = sbr.rel (%p220) target = $region40
    $region39: #{convrnn_forward.3} parent=5 // pred_region
      // Predicated region
      $region41: #{convrnn_forward.3} parent=39 // pred_check
        %p223 = pneg %p33
      $region42: #{convrnn_forward.3} parent=39 // pred_check_branch
        %225 = sbr.rel (%p223) target = $region44
      $region43: #{convrnn_forward.3} parent=39 // pred_region
        %p226 = scmp.lt.s32.totalorder %s13, 7
        %s227 = scalar_select %p226, %s13, 7
        %s228 = smul.addr %s227, 12
        %s229 = smul.addr %s228, 8
        %s230 = scalar_lea.vmem %s0, %s229
      $region44: #{convrnn_forward.3} parent=39 // pred_fallthru
        _
    $region40: #{convrnn_forward.3} parent=5 // pred_fallthru
      _
    %p231 = scmp.le.s32.totalorder 1, %s13
    %p232 = scmp.lt.s32.totalorder %s13, 9
    %p233 = pnand %p231, %p232
    %p234 = pneg %p233
    // Predicated region
    $region45: #{convrnn_forward.3} parent=5 // pred_check
      _
    $region46: #{convrnn_forward.3} parent=5 // pred_check_branch
      %236 = sbr.rel (%p233) target = $region48
    $region47: #{convrnn_forward.3} parent=5 // pred_region
      %s237 = ssub.s32 %s13, 1
      %p238 = scmp.lt.s32.totalorder %s18, 7
      %s239 = scalar_select %p238, %s18, 7
      %s240 = smul.addr %s239, 12
      %s241 = smul.addr %s240, 8
      %s242 = scalar_lea.vmem %s0, %s241
      %p243 = pneg %p39
      %p244 = pneg %p36
      %p245 = pneg %p60
      %p246 = pneg %p57
      %p247 = pneg %p81
      %p248 = pneg %p78
      %p249 = pneg %p102
      %p250 = pneg %p99
      %p251 = pneg %p123
      %p252 = pneg %p120
      %p253 = pneg %p144
      %p254 = pneg %p141
      %p255 = pneg %p165
      %p256 = pneg %p162
      %p257 = pneg %p186
      %p258 = pneg %p183
      %p259 = scmp.lt.s32.totalorder %s18, 7
      %s260 = scalar_select %p259, %s18, 7
      %s261 = smul.addr %s260, 12
      %s262 = smul.addr %s261, 8
      %s263 = scalar_lea.vmem %s0, %s262
      %p264 = scmp.eq.s32.totalorder %s18, 0
      // Predicated region
      $region49: #{convrnn_forward.3} parent=47 // pred_check
        %p265 = pneg %p264
      $region50: #{convrnn_forward.3} parent=47 // pred_check_branch
        %267 = sbr.rel (%p265) target = $region52
      $region51: #{convrnn_forward.3} parent=47 // pred_region
        %vm268 = vcmask 15360
        %269 = vst.msk [vmem:[#allocation2] sm:$0xff] %vm268, 0.0
        %270 = vst.msk [vmem:[#allocation2 + $0x8] sm:$0xff] %vm268, 0.0
        %271 = vst.msk [vmem:[#allocation2 + $0x10] sm:$0xff] %vm268, 0.0
        %272 = vst.msk [vmem:[#allocation2 + $0x18] sm:$0xff] %vm268, 0.0
      $region52: #{convrnn_forward.3} parent=47 // pred_fallthru
        _
      %v273 = vld [vmem:[%s263] sm:$0xff]
      %v274 = vld [vmem:[%s263 + $0x8] sm:$0xff]
      %v275 = vld [vmem:[%s263 + $0x10] sm:$0xff]
      %v276 = vld [vmem:[%s263 + $0x18] sm:$0xff]
      %v277 = vld [vmem:[%s263 + $0x20] sm:$0xff]
      %v278 = vld [vmem:[%s263 + $0x28] sm:$0xff]
      %v279 = vld [vmem:[%s263 + $0x30] sm:$0xff]
      %v280 = vld [vmem:[%s263 + $0x38] sm:$0xff]
      %v281 = vld [vmem:[%s263 + $0x40] sm:$0xff]
      %v282 = vld [vmem:[%s263 + $0x48] sm:$0xff]
      %v283 = vld [vmem:[%s263 + $0x50] sm:$0xff]
      %v284 = vld [vmem:[%s263 + $0x58] sm:$0xff]
      %v285 = vld [vmem:[#allocation2] sm:$0xff]
      %v286 = vld [vmem:[#allocation2 + $0x8] sm:$0xff]
      %v287 = vld [vmem:[#allocation2 + $0x10] sm:$0xff]
      %v288 = vld [vmem:[#allocation2 + $0x18] sm:$0xff]
      %v289 = vld [vmem:[%s1] sm:$0xff]
      %v290 = vld [vmem:[%s1 + $0x8] sm:$0xff]
      %v291 = vld [vmem:[%s1 + $0x10] sm:$0xff]
      %v292 = vld [vmem:[%s1 + $0x18] sm:$0xff]
      %v293 = vld [vmem:[%s1 + $0x20] sm:$0xff]
      %v294 = vld [vmem:[%s1 + $0x28] sm:$0xff]
      %v295 = vld [vmem:[%s1 + $0x30] sm:$0xff]
      %v296 = vld [vmem:[%s1 + $0x38] sm:$0xff]
      %v297 = vld [vmem:[%s1 + $0x40] sm:$0xff]
      %v298 = vld [vmem:[%s1 + $0x48] sm:$0xff]
      %v299 = vld [vmem:[%s1 + $0x50] sm:$0xff]
      %v300 = vld [vmem:[%s1 + $0x58] sm:$0xff]
      %v301 = vld [vmem:[%s2] sm:$0xff]
      %v302 = vld [vmem:[%s2 + $0x8] sm:$0xff]
      %v303 = vld [vmem:[%s2 + $0x10] sm:$0xff]
      %v304 = vld [vmem:[%s2 + $0x18] sm:$0xff]
      %v305 = vld [vmem:[%s2 + $0x20] sm:$0xff]
      %v306 = vld [vmem:[%s2 + $0x28] sm:$0xff]
      %v307 = vld [vmem:[%s2 + $0x30] sm:$0xff]
      %v308 = vld [vmem:[%s2 + $0x38] sm:$0xff]
      %v309 = vld [vmem:[%s2 + $0x40] sm:$0xff]
      %v310 = vld [vmem:[%s2 + $0x48] sm:$0xff]
      %v311 = vld [vmem:[%s2 + $0x50] sm:$0xff]
      %v312 = vld [vmem:[%s2 + $0x58] sm:$0xff]
      %314 = vset.pattern.permute.xlu0 0
      %315 = vperm.xlu0 %314, %v301
      %v316 = vpop.permute.xlu0 %315
      %319 = vset.pattern.permute.xlu0 0
      %320 = vperm.xlu0 %319, %v302
      %v321 = vpop.permute.xlu0 %320
      %324 = vset.pattern.permute.xlu0 0
      %325 = vperm.xlu0 %324, %v303
      %v326 = vpop.permute.xlu0 %325
      %329 = vset.pattern.permute.xlu0 0
      %330 = vperm.xlu0 %329, %v304
      %v331 = vpop.permute.xlu0 %330
      %334 = vset.pattern.permute.xlu0 0
      %335 = vperm.xlu0 %334, %v305
      %v336 = vpop.permute.xlu0 %335
      %339 = vset.pattern.permute.xlu0 0
      %340 = vperm.xlu0 %339, %v306
      %v341 = vpop.permute.xlu0 %340
      %344 = vset.pattern.permute.xlu0 0
      %345 = vperm.xlu0 %344, %v307
      %v346 = vpop.permute.xlu0 %345
      %349 = vset.pattern.permute.xlu0 0
      %350 = vperm.xlu0 %349, %v308
      %v351 = vpop.permute.xlu0 %350
      %354 = vset.pattern.permute.xlu0 0
      %355 = vperm.xlu0 %354, %v309
      %v356 = vpop.permute.xlu0 %355
      %359 = vset.pattern.permute.xlu0 0
      %360 = vperm.xlu0 %359, %v310
      %v361 = vpop.permute.xlu0 %360
      %364 = vset.pattern.permute.xlu0 0
      %365 = vperm.xlu0 %364, %v311
      %v366 = vpop.permute.xlu0 %365
      %369 = vset.pattern.permute.xlu0 0
      %370 = vperm.xlu0 %369, %v312
      %v371 = vpop.permute.xlu0 %370
      %vm373 = vcmask 261120
      %v375 = vsel %vm373, %v289, 0
      %v378 = vsel %vm373, %v290, 0
      %v381 = vsel %vm373, %v291, 0
      %v384 = vsel %vm373, %v292, 0
      %v387 = vsel %vm373, %v293, 0
      %v390 = vsel %vm373, %v294, 0
      %v393 = vsel %vm373, %v295, 0
      %v396 = vsel %vm373, %v296, 0
      %v399 = vsel %vm373, %v297, 0
      %v402 = vsel %vm373, %v298, 0
      %v405 = vsel %vm373, %v299, 0
      %v408 = vsel %vm373, %v300, 0
      %410 = vmatprep.subr.mxu0 0.0
      %411 = vmatpush1.msra.mxu0 %v285
      %412 = vmatprep.subr.mxu0 0.0
      %413 = vmatpush1.msra.mxu0 %v286
      %414 = vmatprep.subr.mxu0 0.0
      %415 = vmatpush1.msra.mxu0 %v287
      %416 = vmatprep.subr.mxu0 0.0
      %417 = vmatpush1.msra.mxu0 %v288
      %418 = vmatprep.subr.mxu0 0.0
      %419 = vmatpush1.msra.mxu0 0.0
      %420 = vmatprep.subr.mxu0 0.0
      %421 = vmatpush1.msra.mxu0 0.0
      %422 = vmatprep.subr.mxu0 0.0
      %423 = vmatpush1.msra.mxu0 0.0
      %424 = vmatprep.subr.mxu0 0.0
      %425 = vmatpush1.msra.mxu0 0.0
      %426 = vmatprep.subr.mxu0 0.0
      %427 = vmatpush1.msra.mxu0 0.0
      %428 = vmatprep.subr.mxu0 0.0
      %429 = vmatpush1.msra.mxu0 0.0
      %430 = vmatprep.subr.mxu0 0.0
      %431 = vmatpush1.msra.mxu0 0.0
      %432 = vmatprep.subr.mxu0 0.0
      %433 = vmatpush1.msra.mxu0 0.0
      %434 = vmatprep.subr.mxu0 0.0
      %435 = vmatpush1.msra.mxu0 0.0
      %436 = vmatprep.subr.mxu0 0.0
      %437 = vmatpush1.msra.mxu0 0.0
      %438 = vmatprep.subr.mxu0 0.0
      %439 = vmatpush1.msra.mxu0 0.0
      %440 = vmatprep.subr.mxu0 0.0
      %441 = vmatpush1.msra.mxu0 0.0
      %442 = vmatprep.subr.mxu0 0.0
      %443 = vmatpush1.msra.mxu0 0.0
      %444 = vmatprep.subr.mxu0 0.0
      %445 = vmatpush1.msra.mxu0 0.0
      %446 = vmatprep.subr.mxu0 0.0
      %447 = vmatpush1.msra.mxu0 0.0
      %448 = vmatprep.subr.mxu0 0.0
      %449 = vmatpush1.msra.mxu0 0.0
      %450 = vmatprep.subr.mxu0 0.0
      %451 = vmatpush1.msra.mxu0 0.0
      %452 = vmatprep.subr.mxu0 0.0
      %453 = vmatpush1.msra.mxu0 0.0
      %454 = vmatprep.subr.mxu0 0.0
      %455 = vmatpush1.msra.mxu0 0.0
      %456 = vmatprep.subr.mxu0 0.0
      %457 = vmatpush1.msra.mxu0 0.0
      %458 = vmatprep.subr.mxu0 0.0
      %459 = vmatpush1.msra.mxu0 0.0
      %460 = vmatprep.subr.mxu0 0.0
      %461 = vmatpush1.msra.mxu0 0.0
      %462 = vmatprep.subr.mxu0 0.0
      %463 = vmatpush1.msra.mxu0 0.0
      %464 = vmatprep.subr.mxu0 0.0
      %465 = vmatpush1.msra.mxu0 0.0
      %466 = vmatprep.subr.mxu0 0.0
      %467 = vmatpush1.msra.mxu0 0.0
      %468 = vmatprep.subr.mxu0 0.0
      %469 = vmatpush1.msra.mxu0 0.0
      %470 = vmatprep.subr.mxu0 0.0
      %471 = vmatpush1.msra.mxu0 0.0
      %472 = vmatprep.subr.mxu0 0.0
      %473 = vmatpush1.msra.mxu0 0.0
      %474 = vmatprep.mubr.f32.mxu0 0.0
      %475 = vmatmul.mubr.f32.gmra.mrb[0].mxu0 %v375
      %v476 = vpop.f32.mrb[0].mxu0
      %v477 = vadd.f32 %v316, %v476
      %v478 = vpop.f32.mrb[0].mxu0
      %479 = vmatprep.mubr.f32.mxu0 0.0
      %480 = vmatmul.mubr.f32.gmra.mrb[0].mxu0 %v378
      %v481 = vpop.f32.mrb[0].mxu0
      %v482 = vadd.f32 %v321, %v481
      %v483 = vpop.f32.mrb[0].mxu0
      %484 = vmatprep.mubr.f32.mxu0 0.0
      %485 = vmatmul.mubr.f32.gmra.mrb[0].mxu0 %v381
      %v486 = vpop.f32.mrb[0].mxu0
      %v487 = vadd.f32 %v326, %v486
      %v488 = vpop.f32.mrb[0].mxu0
      %489 = vmatprep.mubr.f32.mxu0 0.0
      %490 = vmatmul.mubr.f32.gmra.mrb[0].mxu0 %v384
      %v491 = vpop.f32.mrb[0].mxu0
      %v492 = vadd.f32 %v331, %v491
      %v493 = vpop.f32.mrb[0].mxu0
      %494 = vmatprep.mubr.f32.mxu0 0.0
      %495 = vmatmul.mubr.f32.gmra.mrb[0].mxu0 %v387
      %v496 = vpop.f32.mrb[0].mxu0
      %v497 = vadd.f32 %v336, %v496
      %v498 = vpop.f32.mrb[0].mxu0
      %499 = vmatprep.mubr.f32.mxu0 0.0
      %500 = vmatmul.mubr.f32.gmra.mrb[0].mxu0 %v390
      %v501 = vpop.f32.mrb[0].mxu0
      %v502 = vadd.f32 %v341, %v501
      %v503 = vpop.f32.mrb[0].mxu0
      %504 = vmatprep.mubr.f32.mxu0 0.0
      %505 = vmatmul.mubr.f32.gmra.mrb[0].mxu0 %v393
      %v506 = vpop.f32.mrb[0].mxu0
      %v507 = vadd.f32 %v346, %v506
      %v508 = vpop.f32.mrb[0].mxu0
      %509 = vmatprep.mubr.f32.mxu0 0.0
      %510 = vmatmul.mubr.f32.gmra.mrb[0].mxu0 %v396
      %v511 = vpop.f32.mrb[0].mxu0
      %v512 = vadd.f32 %v351, %v511
      %v513 = vpop.f32.mrb[0].mxu0
      %514 = vmatprep.mubr.f32.mxu0 0.0
      %515 = vmatmul.mubr.f32.gmra.mrb[0].mxu0 %v399
      %v516 = vpop.f32.mrb[0].mxu0
      %v517 = vadd.f32 %v356, %v516
      %v518 = vpop.f32.mrb[0].mxu0
      %519 = vmatprep.mubr.f32.mxu0 0.0
      %520 = vmatmul.mubr.f32.gmra.mrb[0].mxu0 %v402
      %v521 = vpop.f32.mrb[0].mxu0
      %v522 = vadd.f32 %v361, %v521
      %v523 = vpop.f32.mrb[0].mxu0
      %524 = vmatprep.mubr.f32.mxu0 0.0
      %525 = vmatmul.mubr.f32.gmra.mrb[0].mxu0 %v405
      %v526 = vpop.f32.mrb[0].mxu0
      %v527 = vadd.f32 %v366, %v526
      %v528 = vpop.f32.mrb[0].mxu0
      %529 = vmatprep.mubr.f32.mxu0 0.0
      %530 = vmatmul.mubr.f32.gmra.mrb[0].mxu0 %v408
      %v531 = vpop.f32.mrb[0].mxu0
      %v532 = vadd.f32 %v371, %v531
      %v533 = vpop.f32.mrb[0].mxu0
      %534 = vdwg.mxu0
      %v535 = vadd.f32 %v273, %v477
      %v536 = vadd.f32 %v274, %v482
      %v537 = vadd.f32 %v275, %v487
      %v538 = vadd.f32 %v276, %v492
      %v539 = vxor.u32 %v535, 2147483648
      %v540 = vxor.u32 %v536, 2147483648
      %v541 = vxor.u32 %v537, 2147483648
      %v542 = vxor.u32 %v538, 2147483648
      %v543 = vmul.f32 %v539, 1.442695
      %v544 = vpow.pop %v543
      %v545 = vmul.f32 %v540, 1.442695
      %v546 = vpow.pop %v545
      %v547 = vmul.f32 %v541, 1.442695
      %v548 = vpow.pop %v547
      %v549 = vmul.f32 %v542, 1.442695
      %v550 = vpow.pop %v549
      %v551 = vadd.f32 %v544, 1.0
      %v552 = vadd.f32 %v546, 1.0
      %v553 = vadd.f32 %v548, 1.0
      %v554 = vadd.f32 %v550, 1.0
      %v555 = vrcp.pop %v551
      %v556 = vmul.f32 1.0, %v555
      %v557 = vrcp.pop %v552
      %v558 = vmul.f32 1.0, %v557
      %v559 = vrcp.pop %v553
      %v560 = vmul.f32 1.0, %v559
      %v561 = vrcp.pop %v554
      %v562 = vmul.f32 1.0, %v561
      %v563 = vadd.f32 %v277, %v497
      %v564 = vadd.f32 %v278, %v502
      %v565 = vadd.f32 %v279, %v507
      %v566 = vadd.f32 %v280, %v512
      %v567 = vxor.u32 %v563, 2147483648
      %v568 = vxor.u32 %v564, 2147483648
      %v569 = vxor.u32 %v565, 2147483648
      %v570 = vxor.u32 %v566, 2147483648
      %v571 = vmul.f32 %v567, 1.442695
      %v572 = vpow.pop %v571
      %v573 = vmul.f32 %v568, 1.442695
      %v574 = vpow.pop %v573
      %v575 = vmul.f32 %v569, 1.442695
      %v576 = vpow.pop %v575
      %v577 = vmul.f32 %v570, 1.442695
      %v578 = vpow.pop %v577
      %v579 = vadd.f32 %v572, 1.0
      %v580 = vadd.f32 %v574, 1.0
      %v581 = vadd.f32 %v576, 1.0
      %v582 = vadd.f32 %v578, 1.0
      %v583 = vrcp.pop %v579
      %v584 = vmul.f32 1.0, %v583
      %v585 = vrcp.pop %v580
      %v586 = vmul.f32 1.0, %v585
      %v587 = vrcp.pop %v581
      %v588 = vmul.f32 1.0, %v587
      %v589 = vrcp.pop %v582
      %v590 = vmul.f32 1.0, %v589
      %v591 = vmul.f32 %v556, %v517
      %v592 = vmul.f32 %v558, %v522
      %v593 = vmul.f32 %v560, %v527
      %v594 = vmul.f32 %v562, %v532
      %v595 = vadd.f32 %v281, %v591
      %v596 = vadd.f32 %v282, %v592
      %v597 = vadd.f32 %v283, %v593
      %v598 = vadd.f32 %v284, %v594
      %v599 = vtanh.pop %v595
      %v600 = vtanh.pop %v596
      %v601 = vtanh.pop %v597
      %v602 = vtanh.pop %v598
      %v603 = vsub.f32 1.0, %v584
      %v604 = vsub.f32 1.0, %v586
      %v605 = vsub.f32 1.0, %v588
      %v606 = vsub.f32 1.0, %v590
      %v607 = vmul.f32 %v603, %v599
      %v608 = vmul.f32 %v604, %v600
      %v609 = vmul.f32 %v605, %v601
      %v610 = vmul.f32 %v606, %v602
      %v611 = vmul.f32 %v584, %v285
      %v612 = vmul.f32 %v586, %v286
      %v613 = vmul.f32 %v588, %v287
      %v614 = vmul.f32 %v590, %v288
      %v615 = vadd.f32 %v607, %v611
      %v616 = vadd.f32 %v608, %v612
      %v617 = vadd.f32 %v609, %v613
      %v618 = vadd.f32 %v610, %v614
      %vm619 = vcmask 15360
      %620 = vst.msk [vmem:[#allocation2] sm:$0xff] %vm619, %v615
      %621 = vst.msk [vmem:[#allocation2 + $0x8] sm:$0xff] %vm619, %v616
      %622 = vst.msk [vmem:[#allocation2 + $0x10] sm:$0xff] %vm619, %v617
      %623 = vst.msk [vmem:[#allocation2 + $0x18] sm:$0xff] %vm619, %v618
      %p624 = scmp.eq.s32.totalorder %s18, 7
      // Predicated region
      $region53: #{convrnn_forward.3} parent=47 // pred_check
        %p625 = pneg %p624
      $region54: #{convrnn_forward.3} parent=47 // pred_check_branch
        %627 = sbr.rel (%p625) target = $region56
      $region55: #{convrnn_forward.3} parent=47 // pred_region
        %v628 = vld [vmem:[%s3] sm:$0xff]
        %v629 = vld [vmem:[%s3 + $0x8] sm:$0xff]
        %v630 = vld [vmem:[%s3 + $0x10] sm:$0xff]
        %v631 = vld [vmem:[%s3 + $0x18] sm:$0xff]
        %v632 = vld [vmem:[%s3 + $0x20] sm:$0xff]
        %v633 = vld [vmem:[%s3 + $0x28] sm:$0xff]
        %v634 = vld [vmem:[%s3 + $0x30] sm:$0xff]
        %v635 = vld [vmem:[%s3 + $0x38] sm:$0xff]
        %v636 = vld [vmem:[%s4] sm:$0xff]
        %v637 = vld [vmem:[%s4 + $0x8] sm:$0xff]
        %v638 = vld [vmem:[%s4 + $0x10] sm:$0xff]
        %v639 = vld [vmem:[%s4 + $0x18] sm:$0xff]
        %v640 = vld [vmem:[%s4 + $0x20] sm:$0xff]
        %v641 = vld [vmem:[%s4 + $0x28] sm:$0xff]
        %v642 = vld [vmem:[%s4 + $0x30] sm:$0xff]
        %v643 = vld [vmem:[%s4 + $0x38] sm:$0xff]
        %645 = vset.pattern.permute.xlu0 0
        %646 = vperm.xlu0 %645, %v636
        %v647 = vpop.permute.xlu0 %646
        %650 = vset.pattern.permute.xlu0 0
        %651 = vperm.xlu0 %650, %v637
        %v652 = vpop.permute.xlu0 %651
        %655 = vset.pattern.permute.xlu0 0
        %656 = vperm.xlu0 %655, %v638
        %v657 = vpop.permute.xlu0 %656
        %660 = vset.pattern.permute.xlu0 0
        %661 = vperm.xlu0 %660, %v639
        %v662 = vpop.permute.xlu0 %661
        %665 = vset.pattern.permute.xlu0 0
        %666 = vperm.xlu0 %665, %v640
        %v667 = vpop.permute.xlu0 %666
        %670 = vset.pattern.permute.xlu0 0
        %671 = vperm.xlu0 %670, %v641
        %v672 = vpop.permute.xlu0 %671
        %675 = vset.pattern.permute.xlu0 0
        %676 = vperm.xlu0 %675, %v642
        %v677 = vpop.permute.xlu0 %676
        %680 = vset.pattern.permute.xlu0 0
        %681 = vperm.xlu0 %680, %v643
        %v682 = vpop.permute.xlu0 %681
        %v685 = vsel %vm373, %v628, 0
        %v688 = vsel %vm373, %v629, 0
        %v691 = vsel %vm373, %v630, 0
        %v694 = vsel %vm373, %v631, 0
        %v697 = vsel %vm373, %v632, 0
        %v700 = vsel %vm373, %v633, 0
        %v703 = vsel %vm373, %v634, 0
        %v706 = vsel %vm373, %v635, 0
        %708 = vmatprep.subr.mxu0 0.0
        %709 = vmatpush1.msra.mxu0 %v615
        %710 = vmatprep.subr.mxu0 0.0
        %711 = vmatpush1.msra.mxu0 %v616
        %712 = vmatprep.subr.mxu0 0.0
        %713 = vmatpush1.msra.mxu0 %v617
        %714 = vmatprep.subr.mxu0 0.0
        %715 = vmatpush1.msra.mxu0 %v618
        %716 = vmatprep.subr.mxu0 0.0
        %717 = vmatpush1.msra.mxu0 0.0
        %718 = vmatprep.subr.mxu0 0.0
        %719 = vmatpush1.msra.mxu0 0.0
        %720 = vmatprep.subr.mxu0 0.0
        %721 = vmatpush1.msra.mxu0 0.0
        %722 = vmatprep.subr.mxu0 0.0
        %723 = vmatpush1.msra.mxu0 0.0
        %724 = vmatprep.subr.mxu0 0.0
        %725 = vmatpush1.msra.mxu0 0.0
        %726 = vmatprep.subr.mxu0 0.0
        %727 = vmatpush1.msra.mxu0 0.0
        %728 = vmatprep.subr.mxu0 0.0
        %729 = vmatpush1.msra.mxu0 0.0
        %730 = vmatprep.subr.mxu0 0.0
        %731 = vmatpush1.msra.mxu0 0.0
        %732 = vmatprep.subr.mxu0 0.0
        %733 = vmatpush1.msra.mxu0 0.0
        %734 = vmatprep.subr.mxu0 0.0
        %735 = vmatpush1.msra.mxu0 0.0
        %736 = vmatprep.subr.mxu0 0.0
        %737 = vmatpush1.msra.mxu0 0.0
        %738 = vmatprep.subr.mxu0 0.0
        %739 = vmatpush1.msra.mxu0 0.0
        %740 = vmatprep.subr.mxu0 0.0
        %741 = vmatpush1.msra.mxu0 0.0
        %742 = vmatprep.subr.mxu0 0.0
        %743 = vmatpush1.msra.mxu0 0.0
        %744 = vmatprep.subr.mxu0 0.0
        %745 = vmatpush1.msra.mxu0 0.0
        %746 = vmatprep.subr.mxu0 0.0
        %747 = vmatpush1.msra.mxu0 0.0
        %748 = vmatprep.subr.mxu0 0.0
        %749 = vmatpush1.msra.mxu0 0.0
        %750 = vmatprep.subr.mxu0 0.0
        %751 = vmatpush1.msra.mxu0 0.0
        %752 = vmatprep.subr.mxu0 0.0
        %753 = vmatpush1.msra.mxu0 0.0
        %754 = vmatprep.subr.mxu0 0.0
        %755 = vmatpush1.msra.mxu0 0.0
        %756 = vmatprep.subr.mxu0 0.0
        %757 = vmatpush1.msra.mxu0 0.0
        %758 = vmatprep.subr.mxu0 0.0
        %759 = vmatpush1.msra.mxu0 0.0
        %760 = vmatprep.subr.mxu0 0.0
        %761 = vmatpush1.msra.mxu0 0.0
        %762 = vmatprep.subr.mxu0 0.0
        %763 = vmatpush1.msra.mxu0 0.0
        %764 = vmatprep.subr.mxu0 0.0
        %765 = vmatpush1.msra.mxu0 0.0
        %766 = vmatprep.subr.mxu0 0.0
        %767 = vmatpush1.msra.mxu0 0.0
        %768 = vmatprep.subr.mxu0 0.0
        %769 = vmatpush1.msra.mxu0 0.0
        %770 = vmatprep.subr.mxu0 0.0
        %771 = vmatpush1.msra.mxu0 0.0
        %772 = vmatprep.mubr.f32.mxu0 0.0
        %773 = vmatmul.mubr.f32.gmra.mrb[0].mxu0 %v685
        %v774 = vpop.f32.mrb[0].mxu0
        %v775 = vadd.f32 %v647, %v774
        %v776 = vpop.f32.mrb[0].mxu0
        %777 = vmatprep.mubr.f32.mxu0 0.0
        %778 = vmatmul.mubr.f32.gmra.mrb[0].mxu0 %v688
        %v779 = vpop.f32.mrb[0].mxu0
        %v780 = vadd.f32 %v652, %v779
        %v781 = vpop.f32.mrb[0].mxu0
        %782 = vmatprep.mubr.f32.mxu0 0.0
        %783 = vmatmul.mubr.f32.gmra.mrb[0].mxu0 %v691
        %v784 = vpop.f32.mrb[0].mxu0
        %v785 = vadd.f32 %v657, %v784
        %v786 = vpop.f32.mrb[0].mxu0
        %787 = vmatprep.mubr.f32.mxu0 0.0
        %788 = vmatmul.mubr.f32.gmra.mrb[0].mxu0 %v694
        %v789 = vpop.f32.mrb[0].mxu0
        %v790 = vadd.f32 %v662, %v789
        %v791 = vpop.f32.mrb[0].mxu0
        %792 = vmatprep.mubr.f32.mxu0 0.0
        %793 = vmatmul.mubr.f32.gmra.mrb[0].mxu0 %v697
        %v794 = vpop.f32.mrb[0].mxu0
        %v795 = vadd.f32 %v667, %v794
        %v796 = vpop.f32.mrb[0].mxu0
        %797 = vmatprep.mubr.f32.mxu0 0.0
        %798 = vmatmul.mubr.f32.gmra.mrb[0].mxu0 %v700
        %v799 = vpop.f32.mrb[0].mxu0
        %v800 = vadd.f32 %v672, %v799
        %v801 = vpop.f32.mrb[0].mxu0
        %802 = vmatprep.mubr.f32.mxu0 0.0
        %803 = vmatmul.mubr.f32.gmra.mrb[0].mxu0 %v703
        %v804 = vpop.f32.mrb[0].mxu0
        %v805 = vadd.f32 %v677, %v804
        %v806 = vpop.f32.mrb[0].mxu0
        %807 = vmatprep.mubr.f32.mxu0 0.0
        %808 = vmatmul.mubr.f32.gmra.mrb[0].mxu0 %v706
        %v809 = vpop.f32.mrb[0].mxu0
        %v810 = vadd.f32 %v682, %v809
        %v811 = vpop.f32.mrb[0].mxu0
        %812 = vdwg.mxu0
        %v813 = vld [vmem:[%s5] sm:$0xff]
        %v814 = vld [vmem:[%s6] sm:$0xff]
        %816 = vset.pattern.permute.xlu0 0
        %817 = vperm.xlu0 %816, %v814
        %v818 = vpop.permute.xlu0 %817
        %vm820 = vcmask 523264
        %v822 = vsel %vm820, %v813, 0
        %824 = vmatprep.subr.mxu0 0.0
        %825 = vmatpush1.msra.mxu0 %v775
        %826 = vmatprep.subr.mxu0 0.0
        %827 = vmatpush1.msra.mxu0 %v780
        %828 = vmatprep.subr.mxu0 0.0
        %829 = vmatpush1.msra.mxu0 %v785
        %830 = vmatprep.subr.mxu0 0.0
        %831 = vmatpush1.msra.mxu0 %v790
        %832 = vmatprep.subr.mxu0 0.0
        %833 = vmatpush1.msra.mxu0 %v795
        %834 = vmatprep.subr.mxu0 0.0
        %835 = vmatpush1.msra.mxu0 %v800
        %836 = vmatprep.subr.mxu0 0.0
        %837 = vmatpush1.msra.mxu0 %v805
        %838 = vmatprep.subr.mxu0 0.0
        %839 = vmatpush1.msra.mxu0 %v810
        %840 = vmatprep.subr.mxu0 0.0
        %841 = vmatpush1.msra.mxu0 0.0
        %842 = vmatprep.subr.mxu0 0.0
        %843 = vmatpush1.msra.mxu0 0.0
        %844 = vmatprep.subr.mxu0 0.0
        %845 = vmatpush1.msra.mxu0 0.0
        %846 = vmatprep.subr.mxu0 0.0
        %847 = vmatpush1.msra.mxu0 0.0
        %848 = vmatprep.subr.mxu0 0.0
        %849 = vmatpush1.msra.mxu0 0.0
        %850 = vmatprep.subr.mxu0 0.0
        %851 = vmatpush1.msra.mxu0 0.0
        %852 = vmatprep.subr.mxu0 0.0
        %853 = vmatpush1.msra.mxu0 0.0
        %854 = vmatprep.subr.mxu0 0.0
        %855 = vmatpush1.msra.mxu0 0.0
        %856 = vmatprep.subr.mxu0 0.0
        %857 = vmatpush1.msra.mxu0 0.0
        %858 = vmatprep.subr.mxu0 0.0
        %859 = vmatpush1.msra.mxu0 0.0
        %860 = vmatprep.subr.mxu0 0.0
        %861 = vmatpush1.msra.mxu0 0.0
        %862 = vmatprep.subr.mxu0 0.0
        %863 = vmatpush1.msra.mxu0 0.0
        %864 = vmatprep.subr.mxu0 0.0
        %865 = vmatpush1.msra.mxu0 0.0
        %866 = vmatprep.subr.mxu0 0.0
        %867 = vmatpush1.msra.mxu0 0.0
        %868 = vmatprep.subr.mxu0 0.0
        %869 = vmatpush1.msra.mxu0 0.0
        %870 = vmatprep.subr.mxu0 0.0
        %871 = vmatpush1.msra.mxu0 0.0
        %872 = vmatprep.subr.mxu0 0.0
        %873 = vmatpush1.msra.mxu0 0.0
        %874 = vmatprep.subr.mxu0 0.0
        %875 = vmatpush1.msra.mxu0 0.0
        %876 = vmatprep.subr.mxu0 0.0
        %877 = vmatpush1.msra.mxu0 0.0
        %878 = vmatprep.subr.mxu0 0.0
        %879 = vmatpush1.msra.mxu0 0.0
        %880 = vmatprep.subr.mxu0 0.0
        %881 = vmatpush1.msra.mxu0 0.0
        %882 = vmatprep.subr.mxu0 0.0
        %883 = vmatpush1.msra.mxu0 0.0
        %884 = vmatprep.subr.mxu0 0.0
        %885 = vmatpush1.msra.mxu0 0.0
        %886 = vmatprep.subr.mxu0 0.0
        %887 = vmatpush1.msra.mxu0 0.0
        %888 = vmatprep.mubr.f32.mxu0 0.0
        %889 = vmatmul.mubr.f32.gmra.mrb[0].mxu0 %v822
        %v890 = vpop.f32.mrb[0].mxu0
        %v891 = vadd.f32 %v818, %v890
        %v892 = vpop.f32.mrb[0].mxu0
        %893 = vdwg.mxu0
        %894 = vst.msk [vmem:[%s7] sm:$0xff] %vm619, %v891
      $region56: #{convrnn_forward.3} parent=47 // pred_fallthru
        _
      // Predicated region
      $region57: #{convrnn_forward.3} parent=47 // pred_check
        %p895 = pneg %p183
      $region58: #{convrnn_forward.3} parent=47 // pred_check_branch
        %897 = sbr.rel (%p895) target = $region60
      $region59: #{convrnn_forward.3} parent=47 // pred_region
        _
      $region60: #{convrnn_forward.3} parent=47 // pred_fallthru
        _
      // Predicated region
      $region61: #{convrnn_forward.3} parent=47 // pred_check
        %p898 = pneg %p183
      $region62: #{convrnn_forward.3} parent=47 // pred_check_branch
        %900 = sbr.rel (%p898) target = $region64
      $region63: #{convrnn_forward.3} parent=47 // pred_region
        _
      $region64: #{convrnn_forward.3} parent=47 // pred_fallthru
        _
    $region48: #{convrnn_forward.3} parent=5 // pred_fallthru
      _
    %p901 = scmp.le.s32.totalorder 2, %s13
    // Predicated region
    $region65: #{convrnn_forward.3} parent=5 // pred_check
      %p902 = pneg %p901
    $region66: #{convrnn_forward.3} parent=5 // pred_check_branch
      %904 = sbr.rel (%p902) target = $region68
    $region67: #{convrnn_forward.3} parent=5 // pred_region
      %s905 = ssub.s32 %s13, 2
    $region68: #{convrnn_forward.3} parent=5 // pred_fallthru
      _
  $region6: #{convrnn_forward.3} parent=0 // loop_footer
    %s17 = sadd.s32 1, %s13
  $region7: #{convrnn_forward.3} parent=0 // loop_footer_branch
    %12 = sbr.rel target = $region3
  $region8: #{convrnn_forward.3} parent=0 // loop_exit
    _

// kernel: convrnn_forward.2
$region0: #{convrnn_forward.2}
  #allocation0 [shape = 'u32[]', space=smem, size = 0x4, offset = 0x4, fixed_abs, tag = 'smem constant byte address 0x4 - core index']
  #allocation1 [shape = 'u32[144,128]{1,0:T(1,128)}', space=vmem, size = 0x12000, scoped, tag = 'internal scratch']
  %s0 = inlined_call_operand.vmem [shape: f32[8,128,512], index: 0, kind: input, shape index: {}]
  %s1 = inlined_call_operand.vmem [shape: f32[16,128], index: 1, kind: input, shape index: {}]
  %s2 = inlined_call_operand.vmem [shape: f32[16,1], index: 2, kind: input, shape index: {}]
  %s3 = inlined_call_operand.vmem [shape: f32[512,2], index: 3, kind: input, shape index: {}]
  %s4 = inlined_call_operand.vmem [shape: f32[32,16], index: 4, kind: input, shape index: {}]
  %s5 = inlined_call_operand.vmem [shape: f32[32,1], index: 5, kind: input, shape index: {}]
  %s6 = inlined_call_operand.vmem [shape: f32[96,32], index: 6, kind: input, shape index: {}]
  %s7 = inlined_call_operand.vmem [shape: f32[96,1], index: 7, kind: input, shape index: {}]
  %s8 = inlined_call_operand.vmem [shape: f32[8,96,2], index: 8, kind: output, shape index: {}]
  %s9 = sld [smem:[#allocation0]]
  $region65: #{convrnn_forward.2} parent=0
    _
  %s11 = ssub.s32 1, %s9
  %s12 = scalar_select 0, %s11, %s9
  loop: start=0, step=1, limit=10
  $region2: #{convrnn_forward.2} parent=0 // loop_pre_header
    _
  $region3: #{convrnn_forward.2} parent=0 // loop_header
    %s14 = sphi 0, %s18
    %p15 = scmp.ge.s32.totalorder %s14, 10
    %s24 = sphi 0, %s26
    %s27 = sphi 0, %s24
    %s28 = sphi 0, %s27
    %s44 = sphi 0, %s28
    %s48 = sphi 0, %s48
    %s50 = sphi 0, %s48
    %s51 = sphi 0, %s50
    %s65 = sphi 0, %s51
    %s69 = sphi 0, %s69
    %s71 = sphi 0, %s69
    %s72 = sphi 0, %s71
    %s86 = sphi 0, %s72
    %s90 = sphi 0, %s90
    %s92 = sphi 0, %s90
    %s93 = sphi 0, %s92
    %s107 = sphi 0, %s93
    %s111 = sphi 0, %s111
    %s113 = sphi 0, %s111
    %s114 = sphi 0, %s113
    %s128 = sphi 0, %s114
    %s132 = sphi 0, %s132
    %s134 = sphi 0, %s132
    %s135 = sphi 0, %s134
    %s149 = sphi 0, %s135
    %s153 = sphi 0, %s153
    %s155 = sphi 0, %s153
    %s156 = sphi 0, %s155
    %s170 = sphi 0, %s156
    %s174 = sphi 0, %s174
    %s176 = sphi 0, %s174
    %s177 = sphi 0, %s176
    %s191 = sphi 0, %s177
    %s197 = sphi 0, %s199
    %s200 = sphi 0, %s197
    %s201 = sphi 0, %s200
    %s217 = sphi 0, %s201
  $region4: #{convrnn_forward.2} parent=0 // loop_header_branch
    %17 = sbr.rel (%p15) target = $region8
  $region5: #{convrnn_forward.2} parent=0 // loop_body
    %s19 = ssub.s32 %s14, 1
    %s20 = ssub.s32 %s14, 2
    %s21 = sadd.s32 %s14, 1
    %s22 = ssub.s32 %s14, %s21
    %p23 = scmp.eq.s32.totalorder %s22, 0
    %s25 = sadd.s32 %s24, 1
    %s26 = scalar_select %p23, %s24, %s25
    %p29 = pneg %p23
    %p30 = scmp.eq.s32.totalorder %s14, 7
    %p31 = por %p29, %p30
    %p32 = scmp.ne.s32.totalorder %s24, %s27
    %p33 = scmp.eq.s32.totalorder %s14, 0
    %p34 = por %p32, %p33
    %p35 = scmp.ne.s32.totalorder %s24, %s27
    %p36 = scmp.eq.s32.totalorder %s19, 7
    %p37 = por %p35, %p36
    %p38 = scmp.ne.s32.totalorder %s27, %s28
    %p39 = scmp.eq.s32.totalorder %s19, 0
    %p40 = por %p38, %p39
    %p41 = scmp.ne.s32.totalorder %s27, %s28
    %p42 = scmp.eq.s32.totalorder %s20, 7
    %p43 = por %p41, %p42
    %p45 = scmp.ne.s32.totalorder %s28, %s44
    %p46 = scmp.eq.s32.totalorder %s20, 0
    %p47 = por %p45, %p46
    %s49 = sadd.s32 %s48, 1
    %p52 = scmp.eq.s32.totalorder %s14, 7
    %p53 = scmp.ne.s32.totalorder %s48, %s50
    %p54 = scmp.eq.s32.totalorder %s14, 0
    %p55 = por %p53, %p54
    %p56 = scmp.ne.s32.totalorder %s48, %s50
    %p57 = scmp.eq.s32.totalorder %s19, 7
    %p58 = por %p56, %p57
    %p59 = scmp.ne.s32.totalorder %s50, %s51
    %p60 = scmp.eq.s32.totalorder %s19, 0
    %p61 = por %p59, %p60
    %p62 = scmp.ne.s32.totalorder %s50, %s51
    %p63 = scmp.eq.s32.totalorder %s20, 7
    %p64 = por %p62, %p63
    %p66 = scmp.ne.s32.totalorder %s51, %s65
    %p67 = scmp.eq.s32.totalorder %s20, 0
    %p68 = por %p66, %p67
    %s70 = sadd.s32 %s69, 1
    %p73 = scmp.eq.s32.totalorder %s14, 7
    %p74 = scmp.ne.s32.totalorder %s69, %s71
    %p75 = scmp.eq.s32.totalorder %s14, 0
    %p76 = por %p74, %p75
    %p77 = scmp.ne.s32.totalorder %s69, %s71
    %p78 = scmp.eq.s32.totalorder %s19, 7
    %p79 = por %p77, %p78
    %p80 = scmp.ne.s32.totalorder %s71, %s72
    %p81 = scmp.eq.s32.totalorder %s19, 0
    %p82 = por %p80, %p81
    %p83 = scmp.ne.s32.totalorder %s71, %s72
    %p84 = scmp.eq.s32.totalorder %s20, 7
    %p85 = por %p83, %p84
    %p87 = scmp.ne.s32.totalorder %s72, %s86
    %p88 = scmp.eq.s32.totalorder %s20, 0
    %p89 = por %p87, %p88
    %s91 = sadd.s32 %s90, 1
    %p94 = scmp.eq.s32.totalorder %s14, 7
    %p95 = scmp.ne.s32.totalorder %s90, %s92
    %p96 = scmp.eq.s32.totalorder %s14, 0
    %p97 = por %p95, %p96
    %p98 = scmp.ne.s32.totalorder %s90, %s92
    %p99 = scmp.eq.s32.totalorder %s19, 7
    %p100 = por %p98, %p99
    %p101 = scmp.ne.s32.totalorder %s92, %s93
    %p102 = scmp.eq.s32.totalorder %s19, 0
    %p103 = por %p101, %p102
    %p104 = scmp.ne.s32.totalorder %s92, %s93
    %p105 = scmp.eq.s32.totalorder %s20, 7
    %p106 = por %p104, %p105
    %p108 = scmp.ne.s32.totalorder %s93, %s107
    %p109 = scmp.eq.s32.totalorder %s20, 0
    %p110 = por %p108, %p109
    %s112 = sadd.s32 %s111, 1
    %p115 = scmp.eq.s32.totalorder %s14, 7
    %p116 = scmp.ne.s32.totalorder %s111, %s113
    %p117 = scmp.eq.s32.totalorder %s14, 0
    %p118 = por %p116, %p117
    %p119 = scmp.ne.s32.totalorder %s111, %s113
    %p120 = scmp.eq.s32.totalorder %s19, 7
    %p121 = por %p119, %p120
    %p122 = scmp.ne.s32.totalorder %s113, %s114
    %p123 = scmp.eq.s32.totalorder %s19, 0
    %p124 = por %p122, %p123
    %p125 = scmp.ne.s32.totalorder %s113, %s114
    %p126 = scmp.eq.s32.totalorder %s20, 7
    %p127 = por %p125, %p126
    %p129 = scmp.ne.s32.totalorder %s114, %s128
    %p130 = scmp.eq.s32.totalorder %s20, 0
    %p131 = por %p129, %p130
    %s133 = sadd.s32 %s132, 1
    %p136 = scmp.eq.s32.totalorder %s14, 7
    %p137 = scmp.ne.s32.totalorder %s132, %s134
    %p138 = scmp.eq.s32.totalorder %s14, 0
    %p139 = por %p137, %p138
    %p140 = scmp.ne.s32.totalorder %s132, %s134
    %p141 = scmp.eq.s32.totalorder %s19, 7
    %p142 = por %p140, %p141
    %p143 = scmp.ne.s32.totalorder %s134, %s135
    %p144 = scmp.eq.s32.totalorder %s19, 0
    %p145 = por %p143, %p144
    %p146 = scmp.ne.s32.totalorder %s134, %s135
    %p147 = scmp.eq.s32.totalorder %s20, 7
    %p148 = por %p146, %p147
    %p150 = scmp.ne.s32.totalorder %s135, %s149
    %p151 = scmp.eq.s32.totalorder %s20, 0
    %p152 = por %p150, %p151
    %s154 = sadd.s32 %s153, 1
    %p157 = scmp.eq.s32.totalorder %s14, 7
    %p158 = scmp.ne.s32.totalorder %s153, %s155
    %p159 = scmp.eq.s32.totalorder %s14, 0
    %p160 = por %p158, %p159
    %p161 = scmp.ne.s32.totalorder %s153, %s155
    %p162 = scmp.eq.s32.totalorder %s19, 7
    %p163 = por %p161, %p162
    %p164 = scmp.ne.s32.totalorder %s155, %s156
    %p165 = scmp.eq.s32.totalorder %s19, 0
    %p166 = por %p164, %p165
    %p167 = scmp.ne.s32.totalorder %s155, %s156
    %p168 = scmp.eq.s32.totalorder %s20, 7
    %p169 = por %p167, %p168
    %p171 = scmp.ne.s32.totalorder %s156, %s170
    %p172 = scmp.eq.s32.totalorder %s20, 0
    %p173 = por %p171, %p172
    %s175 = sadd.s32 %s174, 1
    %p178 = scmp.eq.s32.totalorder %s14, 7
    %p179 = scmp.ne.s32.totalorder %s174, %s176
    %p180 = scmp.eq.s32.totalorder %s14, 0
    %p181 = por %p179, %p180
    %p182 = scmp.ne.s32.totalorder %s174, %s176
    %p183 = scmp.eq.s32.totalorder %s19, 7
    %p184 = por %p182, %p183
    %p185 = scmp.ne.s32.totalorder %s176, %s177
    %p186 = scmp.eq.s32.totalorder %s19, 0
    %p187 = por %p185, %p186
    %p188 = scmp.ne.s32.totalorder %s176, %s177
    %p189 = scmp.eq.s32.totalorder %s20, 7
    %p190 = por %p188, %p189
    %p192 = scmp.ne.s32.totalorder %s177, %s191
    %p193 = scmp.eq.s32.totalorder %s20, 0
    %p194 = por %p192, %p193
    %s195 = ssub.s32 %s14, %s21
    %p196 = scmp.eq.s32.totalorder %s195, 0
    %s198 = sadd.s32 %s197, 1
    %s199 = scalar_select %p196, %s197, %s198
    %p202 = pneg %p196
    %p203 = scmp.eq.s32.totalorder %s14, 7
    %p204 = por %p202, %p203
    %p205 = scmp.ne.s32.totalorder %s197, %s200
    %p206 = scmp.eq.s32.totalorder %s14, 0
    %p207 = por %p205, %p206
    %p208 = scmp.ne.s32.totalorder %s197, %s200
    %p209 = scmp.eq.s32.totalorder %s19, 7
    %p210 = por %p208, %p209
    %p211 = scmp.ne.s32.totalorder %s200, %s201
    %p212 = scmp.eq.s32.totalorder %s19, 0
    %p213 = por %p211, %p212
    %p214 = scmp.ne.s32.totalorder %s200, %s201
    %p215 = scmp.eq.s32.totalorder %s20, 7
    %p216 = por %p214, %p215
    %p218 = scmp.ne.s32.totalorder %s201, %s217
    %p219 = scmp.eq.s32.totalorder %s20, 0
    %p220 = por %p218, %p219
    %p221 = scmp.le.s32.totalorder 1, %s14
    %p222 = scmp.lt.s32.totalorder %s14, 9
    %p223 = pnand %p221, %p222
    %p224 = pneg %p223
    // Predicated region
    $region9: #{convrnn_forward.2} parent=5 // pred_check
      _
    $region10: #{convrnn_forward.2} parent=5 // pred_check_branch
      %226 = sbr.rel (%p223) target = $region12
    $region11: #{convrnn_forward.2} parent=5 // pred_region
      %s227 = ssub.s32 %s14, 1
      // Predicated region
      $region13: #{convrnn_forward.2} parent=11 // pred_check
        %p228 = pneg %p61
      $region14: #{convrnn_forward.2} parent=11 // pred_check_branch
        %230 = sbr.rel (%p228) target = $region16
      $region15: #{convrnn_forward.2} parent=11 // pred_region
        _
      $region16: #{convrnn_forward.2} parent=11 // pred_fallthru
        _
      // Predicated region
      $region17: #{convrnn_forward.2} parent=11 // pred_check
        %p231 = pneg %p82
      $region18: #{convrnn_forward.2} parent=11 // pred_check_branch
        %233 = sbr.rel (%p231) target = $region20
      $region19: #{convrnn_forward.2} parent=11 // pred_region
        _
      $region20: #{convrnn_forward.2} parent=11 // pred_fallthru
        _
      // Predicated region
      $region21: #{convrnn_forward.2} parent=11 // pred_check
        %p234 = pneg %p103
      $region22: #{convrnn_forward.2} parent=11 // pred_check_branch
        %236 = sbr.rel (%p234) target = $region24
      $region23: #{convrnn_forward.2} parent=11 // pred_region
        _
      $region24: #{convrnn_forward.2} parent=11 // pred_fallthru
        _
      // Predicated region
      $region25: #{convrnn_forward.2} parent=11 // pred_check
        %p237 = pneg %p124
      $region26: #{convrnn_forward.2} parent=11 // pred_check_branch
        %239 = sbr.rel (%p237) target = $region28
      $region27: #{convrnn_forward.2} parent=11 // pred_region
        _
      $region28: #{convrnn_forward.2} parent=11 // pred_fallthru
        _
      // Predicated region
      $region29: #{convrnn_forward.2} parent=11 // pred_check
        %p240 = pneg %p145
      $region30: #{convrnn_forward.2} parent=11 // pred_check_branch
        %242 = sbr.rel (%p240) target = $region32
      $region31: #{convrnn_forward.2} parent=11 // pred_region
        _
      $region32: #{convrnn_forward.2} parent=11 // pred_fallthru
        _
      // Predicated region
      $region33: #{convrnn_forward.2} parent=11 // pred_check
        %p243 = pneg %p166
      $region34: #{convrnn_forward.2} parent=11 // pred_check_branch
        %245 = sbr.rel (%p243) target = $region36
      $region35: #{convrnn_forward.2} parent=11 // pred_region
        _
      $region36: #{convrnn_forward.2} parent=11 // pred_fallthru
        _
      // Predicated region
      $region37: #{convrnn_forward.2} parent=11 // pred_check
        %p246 = pneg %p187
      $region38: #{convrnn_forward.2} parent=11 // pred_check_branch
        %248 = sbr.rel (%p246) target = $region40
      $region39: #{convrnn_forward.2} parent=11 // pred_region
        _
      $region40: #{convrnn_forward.2} parent=11 // pred_fallthru
        _
    $region12: #{convrnn_forward.2} parent=5 // pred_fallthru
      _
    %p249 = scmp.lt.s32.totalorder %s14, 8
    // Predicated region
    $region41: #{convrnn_forward.2} parent=5 // pred_check
      %p250 = pneg %p249
    $region42: #{convrnn_forward.2} parent=5 // pred_check_branch
      %252 = sbr.rel (%p250) target = $region44
    $region43: #{convrnn_forward.2} parent=5 // pred_region
      // Predicated region
      $region45: #{convrnn_forward.2} parent=43 // pred_check
        %p253 = pneg %p34
      $region46: #{convrnn_forward.2} parent=43 // pred_check_branch
        %255 = sbr.rel (%p253) target = $region48
      $region47: #{convrnn_forward.2} parent=43 // pred_region
        %p256 = scmp.lt.s32.totalorder %s14, 7
        %s257 = scalar_select %p256, %s14, 7
        %s258 = smul.addr %s257, 64
        %s259 = smul.addr %s258, 8
        %s260 = scalar_lea.vmem %s0, %s259
      $region48: #{convrnn_forward.2} parent=43 // pred_fallthru
        _
    $region44: #{convrnn_forward.2} parent=5 // pred_fallthru
      _
    %p261 = scmp.le.s32.totalorder 1, %s14
    %p262 = scmp.lt.s32.totalorder %s14, 9
    %p263 = pnand %p261, %p262
    %p264 = pneg %p263
    // Predicated region
    $region49: #{convrnn_forward.2} parent=5 // pred_check
      _
    $region50: #{convrnn_forward.2} parent=5 // pred_check_branch
      %266 = sbr.rel (%p263) target = $region52
    $region51: #{convrnn_forward.2} parent=5 // pred_region
      %s267 = ssub.s32 %s14, 1
      %p268 = scmp.lt.s32.totalorder %s19, 7
      %s269 = scalar_select %p268, %s19, 7
      %s270 = smul.addr %s269, 64
      %s271 = smul.addr %s270, 8
      %s272 = scalar_lea.vmem %s0, %s271
      %p273 = pneg %p40
      %p274 = pneg %p37
      %p275 = pneg %p61
      %p276 = pneg %p58
      %p277 = pneg %p82
      %p278 = pneg %p79
      %p279 = pneg %p103
      %p280 = pneg %p100
      %p281 = pneg %p124
      %p282 = pneg %p121
      %p283 = pneg %p145
      %p284 = pneg %p142
      %p285 = pneg %p166
      %p286 = pneg %p163
      %p287 = pneg %p187
      %p288 = pneg %p184
      %p289 = pneg %p213
      %p290 = pneg %p210
      %p291 = scmp.lt.s32.totalorder %s19, 7
      %s292 = scalar_select %p291, %s19, 7
      %s293 = smul.addr %s292, 12
      %s294 = smul.addr %s293, 8
      %s295 = scalar_lea.vmem %s8, %s294
      %p296 = scmp.lt.s32.totalorder %s19, 7
      %s297 = scalar_select %p296, %s19, 7
      %s298 = smul.addr %s297, 64
      %s299 = smul.addr %s298, 8
      %s300 = scalar_lea.vmem %s0, %s299
      %p301 = scmp.lt.s32.totalorder %s19, 7
      %s302 = scalar_select %p301, %s19, 7
      %s303 = smul.addr %s302, 12
      %s304 = smul.addr %s303, 8
      %s305 = scalar_lea.vmem %s8, %s304
      %v306 = vld [vmem:[%s300] sm:$0xff]
      %v307 = vld [vmem:[%s300 + $0x8] sm:$0xff]
      %v308 = vld [vmem:[%s300 + $0x10] sm:$0xff]
      %v309 = vld [vmem:[%s300 + $0x18] sm:$0xff]
      %v310 = vld [vmem:[%s300 + $0x20] sm:$0xff]
      %v311 = vld [vmem:[%s300 + $0x28] sm:$0xff]
      %v312 = vld [vmem:[%s300 + $0x30] sm:$0xff]
      %v313 = vld [vmem:[%s300 + $0x38] sm:$0xff]
      %v314 = vld [vmem:[%s300 + $0x40] sm:$0xff]
      %v315 = vld [vmem:[%s300 + $0x48] sm:$0xff]
      %v316 = vld [vmem:[%s300 + $0x50] sm:$0xff]
      %v317 = vld [vmem:[%s300 + $0x58] sm:$0xff]
      %v318 = vld [vmem:[%s300 + $0x60] sm:$0xff]
      %v319 = vld [vmem:[%s300 + $0x68] sm:$0xff]
      %v320 = vld [vmem:[%s300 + $0x70] sm:$0xff]
      %v321 = vld [vmem:[%s300 + $0x78] sm:$0xff]
      %v322 = vld [vmem:[%s300 + $0x80] sm:$0xff]
      %v323 = vld [vmem:[%s300 + $0x88] sm:$0xff]
      %v324 = vld [vmem:[%s300 + $0x90] sm:$0xff]
      %v325 = vld [vmem:[%s300 + $0x98] sm:$0xff]
      %v326 = vld [vmem:[%s300 + $0xa0] sm:$0xff]
      %v327 = vld [vmem:[%s300 + $0xa8] sm:$0xff]
      %v328 = vld [vmem:[%s300 + $0xb0] sm:$0xff]
      %v329 = vld [vmem:[%s300 + $0xb8] sm:$0xff]
      %v330 = vld [vmem:[%s300 + $0xc0] sm:$0xff]
      %v331 = vld [vmem:[%s300 + $0xc8] sm:$0xff]
      %v332 = vld [vmem:[%s300 + $0xd0] sm:$0xff]
      %v333 = vld [vmem:[%s300 + $0xd8] sm:$0xff]
      %v334 = vld [vmem:[%s300 + $0xe0] sm:$0xff]
      %v335 = vld [vmem:[%s300 + $0xe8] sm:$0xff]
      %v336 = vld [vmem:[%s300 + $0xf0] sm:$0xff]
      %v337 = vld [vmem:[%s300 + $0xf8] sm:$0xff]
      %v338 = vld [vmem:[%s300 + $0x100] sm:$0xff]
      %v339 = vld [vmem:[%s300 + $0x108] sm:$0xff]
      %v340 = vld [vmem:[%s300 + $0x110] sm:$0xff]
      %v341 = vld [vmem:[%s300 + $0x118] sm:$0xff]
      %v342 = vld [vmem:[%s300 + $0x120] sm:$0xff]
      %v343 = vld [vmem:[%s300 + $0x128] sm:$0xff]
      %v344 = vld [vmem:[%s300 + $0x130] sm:$0xff]
      %v345 = vld [vmem:[%s300 + $0x138] sm:$0xff]
      %v346 = vld [vmem:[%s300 + $0x140] sm:$0xff]
      %v347 = vld [vmem:[%s300 + $0x148] sm:$0xff]
      %v348 = vld [vmem:[%s300 + $0x150] sm:$0xff]
      %v349 = vld [vmem:[%s300 + $0x158] sm:$0xff]
      %v350 = vld [vmem:[%s300 + $0x160] sm:$0xff]
      %v351 = vld [vmem:[%s300 + $0x168] sm:$0xff]
      %v352 = vld [vmem:[%s300 + $0x170] sm:$0xff]
      %v353 = vld [vmem:[%s300 + $0x178] sm:$0xff]
      %v354 = vld [vmem:[%s300 + $0x180] sm:$0xff]
      %v355 = vld [vmem:[%s300 + $0x188] sm:$0xff]
      %v356 = vld [vmem:[%s300 + $0x190] sm:$0xff]
      %v357 = vld [vmem:[%s300 + $0x198] sm:$0xff]
      %v358 = vld [vmem:[%s300 + $0x1a0] sm:$0xff]
      %v359 = vld [vmem:[%s300 + $0x1a8] sm:$0xff]
      %v360 = vld [vmem:[%s300 + $0x1b0] sm:$0xff]
      %v361 = vld [vmem:[%s300 + $0x1b8] sm:$0xff]
      %v362 = vld [vmem:[%s300 + $0x1c0] sm:$0xff]
      %v363 = vld [vmem:[%s300 + $0x1c8] sm:$0xff]
      %v364 = vld [vmem:[%s300 + $0x1d0] sm:$0xff]
      %v365 = vld [vmem:[%s300 + $0x1d8] sm:$0xff]
      %v366 = vld [vmem:[%s300 + $0x1e0] sm:$0xff]
      %v367 = vld [vmem:[%s300 + $0x1e8] sm:$0xff]
      %v368 = vld [vmem:[%s300 + $0x1f0] sm:$0xff]
      %v369 = vld [vmem:[%s300 + $0x1f8] sm:$0xff]
      %v370 = vld [vmem:[%s1] sm:$0xff]
      %v371 = vld [vmem:[%s1 + $0x8] sm:$0xff]
      %v372 = vld [vmem:[%s2] sm:$0xff]
      %v373 = vld [vmem:[%s2 + $0x8] sm:$0xff]
      %375 = vset.pattern.permute.xlu0 0
      %376 = vperm.xlu0 %375, %v372
      %v377 = vpop.permute.xlu0 %376
      %380 = vset.pattern.permute.xlu0 0
      %381 = vperm.xlu0 %380, %v373
      %v382 = vpop.permute.xlu0 %381
      %384 = vmatprep.subr.mxu0 %v307
      %385 = vmatpush1.msra.mxu0 %v306
      %386 = vmatprep.subr.mxu0 %v311
      %387 = vmatpush1.msra.mxu0 %v310
      %388 = vmatprep.subr.mxu0 %v315
      %389 = vmatpush1.msra.mxu0 %v314
      %390 = vmatprep.subr.mxu0 %v319
      %391 = vmatpush1.msra.mxu0 %v318
      %392 = vmatprep.subr.mxu0 %v323
      %393 = vmatpush1.msra.mxu0 %v322
      %394 = vmatprep.subr.mxu0 %v327
      %395 = vmatpush1.msra.mxu0 %v326
      %396 = vmatprep.subr.mxu0 %v331
      %397 = vmatpush1.msra.mxu0 %v330
      %398 = vmatprep.subr.mxu0 %v335
      %399 = vmatpush1.msra.mxu0 %v334
      %400 = vmatprep.subr.mxu0 %v339
      %401 = vmatpush1.msra.mxu0 %v338
      %402 = vmatprep.subr.mxu0 %v343
      %403 = vmatpush1.msra.mxu0 %v342
      %404 = vmatprep.subr.mxu0 %v347
      %405 = vmatpush1.msra.mxu0 %v346
      %406 = vmatprep.subr.mxu0 %v351
      %407 = vmatpush1.msra.mxu0 %v350
      %408 = vmatprep.subr.mxu0 %v355
      %409 = vmatpush1.msra.mxu0 %v354
      %410 = vmatprep.subr.mxu0 %v359
      %411 = vmatpush1.msra.mxu0 %v358
      %412 = vmatprep.subr.mxu0 %v363
      %413 = vmatpush1.msra.mxu0 %v362
      %414 = vmatprep.subr.mxu0 %v367
      %415 = vmatpush1.msra.mxu0 %v366
      %416 = vmatprep.subr.mxu0 0.0
      %417 = vmatpush1.msra.mxu0 0.0
      %418 = vmatprep.subr.mxu0 0.0
      %419 = vmatpush1.msra.mxu0 0.0
      %420 = vmatprep.subr.mxu0 0.0
      %421 = vmatpush1.msra.mxu0 0.0
      %422 = vmatprep.subr.mxu0 0.0
      %423 = vmatpush1.msra.mxu0 0.0
      %424 = vmatprep.subr.mxu0 0.0
      %425 = vmatpush1.msra.mxu0 0.0
      %426 = vmatprep.subr.mxu0 0.0
      %427 = vmatpush1.msra.mxu0 0.0
      %428 = vmatprep.subr.mxu0 0.0
      %429 = vmatpush1.msra.mxu0 0.0
      %430 = vmatprep.subr.mxu0 0.0
      %431 = vmatpush1.msra.mxu0 0.0
      %432 = vmatprep.subr.mxu0 0.0
      %433 = vmatpush1.msra.mxu0 0.0
      %434 = vmatprep.subr.mxu0 0.0
      %435 = vmatpush1.msra.mxu0 0.0
      %436 = vmatprep.subr.mxu0 0.0
      %437 = vmatpush1.msra.mxu0 0.0
      %438 = vmatprep.subr.mxu0 0.0
      %439 = vmatpush1.msra.mxu0 0.0
      %440 = vmatprep.subr.mxu0 0.0
      %441 = vmatpush1.msra.mxu0 0.0
      %442 = vmatprep.subr.mxu0 0.0
      %443 = vmatpush1.msra.mxu0 0.0
      %444 = vmatprep.subr.mxu0 0.0
      %445 = vmatpush1.msra.mxu0 0.0
      %446 = vmatprep.subr.mxu0 0.0
      %447 = vmatpush1.msra.mxu0 0.0
      %448 = vmatprep.mubr.f32.mxu0 0.0
      %449 = vmatmul.mubr.f32.gmra.mrb[0].mxu0 %v370
      %v450 = vpop.f32.mrb[0].mxu0
      %v451 = vadd.f32 %v377, %v450
      %v452 = vpop.f32.mrb[0].mxu0
      %v453 = vadd.f32 %v377, %v452
      %454 = vmatprep.mubr.f32.mxu0 0.0
      %455 = vmatmul.mubr.f32.gmra.mrb[0].mxu0 %v371
      %v456 = vpop.f32.mrb[0].mxu0
      %v457 = vadd.f32 %v382, %v456
      %v458 = vpop.f32.mrb[0].mxu0
      %v459 = vadd.f32 %v382, %v458
      %460 = vdwg.mxu0
      %461 = vmatprep.subr.mxu0 %v309
      %462 = vmatpush1.msra.mxu0 %v308
      %463 = vmatprep.subr.mxu0 %v313
      %464 = vmatpush1.msra.mxu0 %v312
      %465 = vmatprep.subr.mxu0 %v317
      %466 = vmatpush1.msra.mxu0 %v316
      %467 = vmatprep.subr.mxu0 %v321
      %468 = vmatpush1.msra.mxu0 %v320
      %469 = vmatprep.subr.mxu0 %v325
      %470 = vmatpush1.msra.mxu0 %v324
      %471 = vmatprep.subr.mxu0 %v329
      %472 = vmatpush1.msra.mxu0 %v328
      %473 = vmatprep.subr.mxu0 %v333
      %474 = vmatpush1.msra.mxu0 %v332
      %475 = vmatprep.subr.mxu0 %v337
      %476 = vmatpush1.msra.mxu0 %v336
      %477 = vmatprep.subr.mxu0 %v341
      %478 = vmatpush1.msra.mxu0 %v340
      %479 = vmatprep.subr.mxu0 %v345
      %480 = vmatpush1.msra.mxu0 %v344
      %481 = vmatprep.subr.mxu0 %v349
      %482 = vmatpush1.msra.mxu0 %v348
      %483 = vmatprep.subr.mxu0 %v353
      %484 = vmatpush1.msra.mxu0 %v352
      %485 = vmatprep.subr.mxu0 %v357
      %486 = vmatpush1.msra.mxu0 %v356
      %487 = vmatprep.subr.mxu0 %v361
      %488 = vmatpush1.msra.mxu0 %v360
      %489 = vmatprep.subr.mxu0 %v365
      %490 = vmatpush1.msra.mxu0 %v364
      %491 = vmatprep.subr.mxu0 %v369
      %492 = vmatpush1.msra.mxu0 %v368
      %493 = vmatprep.subr.mxu0 0.0
      %494 = vmatpush1.msra.mxu0 0.0
      %495 = vmatprep.subr.mxu0 0.0
      %496 = vmatpush1.msra.mxu0 0.0
      %497 = vmatprep.subr.mxu0 0.0
      %498 = vmatpush1.msra.mxu0 0.0
      %499 = vmatprep.subr.mxu0 0.0
      %500 = vmatpush1.msra.mxu0 0.0
      %501 = vmatprep.subr.mxu0 0.0
      %502 = vmatpush1.msra.mxu0 0.0
      %503 = vmatprep.subr.mxu0 0.0
      %504 = vmatpush1.msra.mxu0 0.0
      %505 = vmatprep.subr.mxu0 0.0
      %506 = vmatpush1.msra.mxu0 0.0
      %507 = vmatprep.subr.mxu0 0.0
      %508 = vmatpush1.msra.mxu0 0.0
      %509 = vmatprep.subr.mxu0 0.0
      %510 = vmatpush1.msra.mxu0 0.0
      %511 = vmatprep.subr.mxu0 0.0
      %512 = vmatpush1.msra.mxu0 0.0
      %513 = vmatprep.subr.mxu0 0.0
      %514 = vmatpush1.msra.mxu0 0.0
      %515 = vmatprep.subr.mxu0 0.0
      %516 = vmatpush1.msra.mxu0 0.0
      %517 = vmatprep.subr.mxu0 0.0
      %518 = vmatpush1.msra.mxu0 0.0
      %519 = vmatprep.subr.mxu0 0.0
      %520 = vmatpush1.msra.mxu0 0.0
      %521 = vmatprep.subr.mxu0 0.0
      %522 = vmatpush1.msra.mxu0 0.0
      %523 = vmatprep.subr.mxu0 0.0
      %524 = vmatpush1.msra.mxu0 0.0
      %525 = vmatprep.mubr.f32.mxu0 0.0
      %526 = vmatmul.mubr.f32.gmra.mrb[0].mxu0 %v370
      %v527 = vpop.f32.mrb[0].mxu0
      %v528 = vadd.f32 %v377, %v527
      %v529 = vpop.f32.mrb[0].mxu0
      %v530 = vadd.f32 %v377, %v529
      %531 = vmatprep.mubr.f32.mxu0 0.0
      %532 = vmatmul.mubr.f32.gmra.mrb[0].mxu0 %v371
      %v533 = vpop.f32.mrb[0].mxu0
      %v534 = vadd.f32 %v382, %v533
      %v535 = vpop.f32.mrb[0].mxu0
      %v536 = vadd.f32 %v382, %v535
      %537 = vdwg.mxu0
      %v538 = vmax.f32 %v451, 0.0
      %v539 = vmax.f32 %v453, 0.0
      %v540 = vmax.f32 %v528, 0.0
      %v541 = vmax.f32 %v530, 0.0
      %v542 = vmax.f32 %v457, 0.0
      %v543 = vmax.f32 %v459, 0.0
      %v544 = vmax.f32 %v534, 0.0
      %v545 = vmax.f32 %v536, 0.0
      %v546 = vld [vmem:[%s3] sm:$0xff]
      %v547 = vld [vmem:[%s3 + $0x8] sm:$0xff]
      %v548 = vld [vmem:[%s3 + $0x10] sm:$0xff]
      %v549 = vld [vmem:[%s3 + $0x18] sm:$0xff]
      %v550 = vld [vmem:[%s3 + $0x20] sm:$0xff]
      %v551 = vld [vmem:[%s3 + $0x28] sm:$0xff]
      %v552 = vld [vmem:[%s3 + $0x30] sm:$0xff]
      %v553 = vld [vmem:[%s3 + $0x38] sm:$0xff]
      %v554 = vld [vmem:[%s3 + $0x40] sm:$0xff]
      %v555 = vld [vmem:[%s3 + $0x48] sm:$0xff]
      %v556 = vld [vmem:[%s3 + $0x50] sm:$0xff]
      %v557 = vld [vmem:[%s3 + $0x58] sm:$0xff]
      %v558 = vld [vmem:[%s3 + $0x60] sm:$0xff]
      %v559 = vld [vmem:[%s3 + $0x68] sm:$0xff]
      %v560 = vld [vmem:[%s3 + $0x70] sm:$0xff]
      %v561 = vld [vmem:[%s3 + $0x78] sm:$0xff]
      %v562 = vld [vmem:[%s3 + $0x80] sm:$0xff]
      %v563 = vld [vmem:[%s3 + $0x88] sm:$0xff]
      %v564 = vld [vmem:[%s3 + $0x90] sm:$0xff]
      %v565 = vld [vmem:[%s3 + $0x98] sm:$0xff]
      %v566 = vld [vmem:[%s3 + $0xa0] sm:$0xff]
      %v567 = vld [vmem:[%s3 + $0xa8] sm:$0xff]
      %v568 = vld [vmem:[%s3 + $0xb0] sm:$0xff]
      %v569 = vld [vmem:[%s3 + $0xb8] sm:$0xff]
      %v570 = vld [vmem:[%s3 + $0xc0] sm:$0xff]
      %v571 = vld [vmem:[%s3 + $0xc8] sm:$0xff]
      %v572 = vld [vmem:[%s3 + $0xd0] sm:$0xff]
      %v573 = vld [vmem:[%s3 + $0xd8] sm:$0xff]
      %v574 = vld [vmem:[%s3 + $0xe0] sm:$0xff]
      %v575 = vld [vmem:[%s3 + $0xe8] sm:$0xff]
      %v576 = vld [vmem:[%s3 + $0xf0] sm:$0xff]
      %v577 = vld [vmem:[%s3 + $0xf8] sm:$0xff]
      %v578 = vld [vmem:[%s3 + $0x100] sm:$0xff]
      %v579 = vld [vmem:[%s3 + $0x108] sm:$0xff]
      %v580 = vld [vmem:[%s3 + $0x110] sm:$0xff]
      %v581 = vld [vmem:[%s3 + $0x118] sm:$0xff]
      %v582 = vld [vmem:[%s3 + $0x120] sm:$0xff]
      %v583 = vld [vmem:[%s3 + $0x128] sm:$0xff]
      %v584 = vld [vmem:[%s3 + $0x130] sm:$0xff]
      %v585 = vld [vmem:[%s3 + $0x138] sm:$0xff]
      %v586 = vld [vmem:[%s3 + $0x140] sm:$0xff]
      %v587 = vld [vmem:[%s3 + $0x148] sm:$0xff]
      %v588 = vld [vmem:[%s3 + $0x150] sm:$0xff]
      %v589 = vld [vmem:[%s3 + $0x158] sm:$0xff]
      %v590 = vld [vmem:[%s3 + $0x160] sm:$0xff]
      %v591 = vld [vmem:[%s3 + $0x168] sm:$0xff]
      %v592 = vld [vmem:[%s3 + $0x170] sm:$0xff]
      %v593 = vld [vmem:[%s3 + $0x178] sm:$0xff]
      %v594 = vld [vmem:[%s3 + $0x180] sm:$0xff]
      %v595 = vld [vmem:[%s3 + $0x188] sm:$0xff]
      %v596 = vld [vmem:[%s3 + $0x190] sm:$0xff]
      %v597 = vld [vmem:[%s3 + $0x198] sm:$0xff]
      %v598 = vld [vmem:[%s3 + $0x1a0] sm:$0xff]
      %v599 = vld [vmem:[%s3 + $0x1a8] sm:$0xff]
      %v600 = vld [vmem:[%s3 + $0x1b0] sm:$0xff]
      %v601 = vld [vmem:[%s3 + $0x1b8] sm:$0xff]
      %v602 = vld [vmem:[%s3 + $0x1c0] sm:$0xff]
      %v603 = vld [vmem:[%s3 + $0x1c8] sm:$0xff]
      %v604 = vld [vmem:[%s3 + $0x1d0] sm:$0xff]
      %v605 = vld [vmem:[%s3 + $0x1d8] sm:$0xff]
      %v606 = vld [vmem:[%s3 + $0x1e0] sm:$0xff]
      %v607 = vld [vmem:[%s3 + $0x1e8] sm:$0xff]
      %v608 = vld [vmem:[%s3 + $0x1f0] sm:$0xff]
      %v609 = vld [vmem:[%s3 + $0x1f8] sm:$0xff]
      %610 = vmatprep.subr.mxu0 0.0
      %611 = vmatpush1.msra.mxu0 %v546
      %612 = vmatprep.subr.mxu0 0.0
      %613 = vmatpush1.msra.mxu0 %v547
      %614 = vmatprep.subr.mxu0 0.0
      %615 = vmatpush1.msra.mxu0 %v548
      %616 = vmatprep.subr.mxu0 0.0
      %617 = vmatpush1.msra.mxu0 %v549
      %618 = vmatprep.subr.mxu0 0.0
      %619 = vmatpush1.msra.mxu0 %v550
      %620 = vmatprep.subr.mxu0 0.0
      %621 = vmatpush1.msra.mxu0 %v551
      %622 = vmatprep.subr.mxu0 0.0
      %623 = vmatpush1.msra.mxu0 %v552
      %624 = vmatprep.subr.mxu0 0.0
      %625 = vmatpush1.msra.mxu0 %v553
      %626 = vmatprep.subr.mxu0 0.0
      %627 = vmatpush1.msra.mxu0 %v554
      %628 = vmatprep.subr.mxu0 0.0
      %629 = vmatpush1.msra.mxu0 %v555
      %630 = vmatprep.subr.mxu0 0.0
      %631 = vmatpush1.msra.mxu0 %v556
      %632 = vmatprep.subr.mxu0 0.0
      %633 = vmatpush1.msra.mxu0 %v557
      %634 = vmatprep.subr.mxu0 0.0
      %635 = vmatpush1.msra.mxu0 %v558
      %636 = vmatprep.subr.mxu0 0.0
      %637 = vmatpush1.msra.mxu0 %v559
      %638 = vmatprep.subr.mxu0 0.0
      %639 = vmatpush1.msra.mxu0 %v560
      %640 = vmatprep.subr.mxu0 0.0
      %641 = vmatpush1.msra.mxu0 %v561
      %642 = vmatprep.subr.mxu0 0.0
      %643 = vmatpush1.msra.mxu0 %v562
      %644 = vmatprep.subr.mxu0 0.0
      %645 = vmatpush1.msra.mxu0 %v563
      %646 = vmatprep.subr.mxu0 0.0
      %647 = vmatpush1.msra.mxu0 %v564
      %648 = vmatprep.subr.mxu0 0.0
      %649 = vmatpush1.msra.mxu0 %v565
      %650 = vmatprep.subr.mxu0 0.0
      %651 = vmatpush1.msra.mxu0 %v566
      %652 = vmatprep.subr.mxu0 0.0
      %653 = vmatpush1.msra.mxu0 %v567
      %654 = vmatprep.subr.mxu0 0.0
      %655 = vmatpush1.msra.mxu0 %v568
      %656 = vmatprep.subr.mxu0 0.0
      %657 = vmatpush1.msra.mxu0 %v569
      %658 = vmatprep.subr.mxu0 0.0
      %659 = vmatpush1.msra.mxu0 %v570
      %660 = vmatprep.subr.mxu0 0.0
      %661 = vmatpush1.msra.mxu0 %v571
      %662 = vmatprep.subr.mxu0 0.0
      %663 = vmatpush1.msra.mxu0 %v572
      %664 = vmatprep.subr.mxu0 0.0
      %665 = vmatpush1.msra.mxu0 %v573
      %666 = vmatprep.subr.mxu0 0.0
      %667 = vmatpush1.msra.mxu0 %v574
      %668 = vmatprep.subr.mxu0 0.0
      %669 = vmatpush1.msra.mxu0 %v575
      %670 = vmatprep.subr.mxu0 0.0
      %671 = vmatpush1.msra.mxu0 %v576
      %672 = vmatprep.subr.mxu0 0.0
      %673 = vmatpush1.msra.mxu0 %v577
      %674 = vmatprep.mubr.f32.mxu0 %v539
      %675 = vmatmul.mubr.f32.gmra.mrb[0].mxu0 %v538
      %v676 = vpop.f32.mrb[0].mxu0
      %v677 = vadd.f32 0.0, %v676
      %v678 = vpop.f32.mrb[0].mxu0
      %679 = vmatprep.mubr.f32.mxu0 %v543
      %680 = vmatmul.mubr.f32.gmra.mrb[0].mxu0 %v542
      %v681 = vpop.f32.mrb[0].mxu0
      %v682 = vadd.f32 0.0, %v681
      %v683 = vpop.f32.mrb[0].mxu0
      %684 = vdwg.mxu0
      %685 = vmatprep.subr.mxu0 0.0
      %686 = vmatpush1.msra.mxu0 %v578
      %687 = vmatprep.subr.mxu0 0.0
      %688 = vmatpush1.msra.mxu0 %v579
      %689 = vmatprep.subr.mxu0 0.0
      %690 = vmatpush1.msra.mxu0 %v580
      %691 = vmatprep.subr.mxu0 0.0
      %692 = vmatpush1.msra.mxu0 %v581
      %693 = vmatprep.subr.mxu0 0.0
      %694 = vmatpush1.msra.mxu0 %v582
      %695 = vmatprep.subr.mxu0 0.0
      %696 = vmatpush1.msra.mxu0 %v583
      %697 = vmatprep.subr.mxu0 0.0
      %698 = vmatpush1.msra.mxu0 %v584
      %699 = vmatprep.subr.mxu0 0.0
      %700 = vmatpush1.msra.mxu0 %v585
      %701 = vmatprep.subr.mxu0 0.0
      %702 = vmatpush1.msra.mxu0 %v586
      %703 = vmatprep.subr.mxu0 0.0
      %704 = vmatpush1.msra.mxu0 %v587
      %705 = vmatprep.subr.mxu0 0.0
      %706 = vmatpush1.msra.mxu0 %v588
      %707 = vmatprep.subr.mxu0 0.0
      %708 = vmatpush1.msra.mxu0 %v589
      %709 = vmatprep.subr.mxu0 0.0
      %710 = vmatpush1.msra.mxu0 %v590
      %711 = vmatprep.subr.mxu0 0.0
      %712 = vmatpush1.msra.mxu0 %v591
      %713 = vmatprep.subr.mxu0 0.0
      %714 = vmatpush1.msra.mxu0 %v592
      %715 = vmatprep.subr.mxu0 0.0
      %716 = vmatpush1.msra.mxu0 %v593
      %717 = vmatprep.subr.mxu0 0.0
      %718 = vmatpush1.msra.mxu0 %v594
      %719 = vmatprep.subr.mxu0 0.0
      %720 = vmatpush1.msra.mxu0 %v595
      %721 = vmatprep.subr.mxu0 0.0
      %722 = vmatpush1.msra.mxu0 %v596
      %723 = vmatprep.subr.mxu0 0.0
      %724 = vmatpush1.msra.mxu0 %v597
      %725 = vmatprep.subr.mxu0 0.0
      %726 = vmatpush1.msra.mxu0 %v598
      %727 = vmatprep.subr.mxu0 0.0
      %728 = vmatpush1.msra.mxu0 %v599
      %729 = vmatprep.subr.mxu0 0.0
      %730 = vmatpush1.msra.mxu0 %v600
      %731 = vmatprep.subr.mxu0 0.0
      %732 = vmatpush1.msra.mxu0 %v601
      %733 = vmatprep.subr.mxu0 0.0
      %734 = vmatpush1.msra.mxu0 %v602
      %735 = vmatprep.subr.mxu0 0.0
      %736 = vmatpush1.msra.mxu0 %v603
      %737 = vmatprep.subr.mxu0 0.0
      %738 = vmatpush1.msra.mxu0 %v604
      %739 = vmatprep.subr.mxu0 0.0
      %740 = vmatpush1.msra.mxu0 %v605
      %741 = vmatprep.subr.mxu0 0.0
      %742 = vmatpush1.msra.mxu0 %v606
      %743 = vmatprep.subr.mxu0 0.0
      %744 = vmatpush1.msra.mxu0 %v607
      %745 = vmatprep.subr.mxu0 0.0
      %746 = vmatpush1.msra.mxu0 %v608
      %747 = vmatprep.subr.mxu0 0.0
      %748 = vmatpush1.msra.mxu0 %v609
      %749 = vmatprep.mubr.f32.mxu0 %v541
      %750 = vmatmul.mubr.f32.gmra.mrb[0].mxu0 %v540
      %v751 = vpop.f32.mrb[0].mxu0
      %v752 = vadd.f32 %v677, %v751
      %v753 = vpop.f32.mrb[0].mxu0
      %754 = vmatprep.mubr.f32.mxu0 %v545
      %755 = vmatmul.mubr.f32.gmra.mrb[0].mxu0 %v544
      %v756 = vpop.f32.mrb[0].mxu0
      %v757 = vadd.f32 %v682, %v756
      %v758 = vpop.f32.mrb[0].mxu0
      %759 = vdwg.mxu0
      %v760 = vld [vmem:[%s4] sm:$0xff]
      %v761 = vld [vmem:[%s4 + $0x8] sm:$0xff]
      %v762 = vld [vmem:[%s4 + $0x10] sm:$0xff]
      %v763 = vld [vmem:[%s4 + $0x18] sm:$0xff]
      %v764 = vld [vmem:[%s5] sm:$0xff]
      %v765 = vld [vmem:[%s5 + $0x8] sm:$0xff]
      %v766 = vld [vmem:[%s5 + $0x10] sm:$0xff]
      %v767 = vld [vmem:[%s5 + $0x18] sm:$0xff]
      %769 = vset.pattern.permute.xlu0 0
      %770 = vperm.xlu0 %769, %v764
      %v771 = vpop.permute.xlu0 %770
      %774 = vset.pattern.permute.xlu0 0
      %775 = vperm.xlu0 %774, %v765
      %v776 = vpop.permute.xlu0 %775
      %779 = vset.pattern.permute.xlu0 0
      %780 = vperm.xlu0 %779, %v766
      %v781 = vpop.permute.xlu0 %780
      %784 = vset.pattern.permute.xlu0 0
      %785 = vperm.xlu0 %784, %v767
      %v786 = vpop.permute.xlu0 %785
      %vm788 = vcmask 130048
      %v790 = vsel %vm788, %v760, 0
      %v793 = vsel %vm788, %v761, 0
      %v796 = vsel %vm788, %v762, 0
      %v799 = vsel %vm788, %v763, 0
      %801 = vmatprep.subr.mxu0 0.0
      %802 = vmatpush1.msra.mxu0 %v752
      %803 = vmatprep.subr.mxu0 0.0
      %804 = vmatpush1.msra.mxu0 %v757
      %805 = vmatprep.subr.mxu0 0.0
      %806 = vmatpush1.msra.mxu0 0.0
      %807 = vmatprep.subr.mxu0 0.0
      %808 = vmatpush1.msra.mxu0 0.0
      %809 = vmatprep.subr.mxu0 0.0
      %810 = vmatpush1.msra.mxu0 0.0
      %811 = vmatprep.subr.mxu0 0.0
      %812 = vmatpush1.msra.mxu0 0.0
      %813 = vmatprep.subr.mxu0 0.0
      %814 = vmatpush1.msra.mxu0 0.0
      %815 = vmatprep.subr.mxu0 0.0
      %816 = vmatpush1.msra.mxu0 0.0
      %817 = vmatprep.subr.mxu0 0.0
      %818 = vmatpush1.msra.mxu0 0.0
      %819 = vmatprep.subr.mxu0 0.0
      %820 = vmatpush1.msra.mxu0 0.0
      %821 = vmatprep.subr.mxu0 0.0
      %822 = vmatpush1.msra.mxu0 0.0
      %823 = vmatprep.subr.mxu0 0.0
      %824 = vmatpush1.msra.mxu0 0.0
      %825 = vmatprep.subr.mxu0 0.0
      %826 = vmatpush1.msra.mxu0 0.0
      %827 = vmatprep.subr.mxu0 0.0
      %828 = vmatpush1.msra.mxu0 0.0
      %829 = vmatprep.subr.mxu0 0.0
      %830 = vmatpush1.msra.mxu0 0.0
      %831 = vmatprep.subr.mxu0 0.0
      %832 = vmatpush1.msra.mxu0 0.0
      %833 = vmatprep.subr.mxu0 0.0
      %834 = vmatpush1.msra.mxu0 0.0
      %835 = vmatprep.subr.mxu0 0.0
      %836 = vmatpush1.msra.mxu0 0.0
      %837 = vmatprep.subr.mxu0 0.0
      %838 = vmatpush1.msra.mxu0 0.0
      %839 = vmatprep.subr.mxu0 0.0
      %840 = vmatpush1.msra.mxu0 0.0
      %841 = vmatprep.subr.mxu0 0.0
      %842 = vmatpush1.msra.mxu0 0.0
      %843 = vmatprep.subr.mxu0 0.0
      %844 = vmatpush1.msra.mxu0 0.0
      %845 = vmatprep.subr.mxu0 0.0
      %846 = vmatpush1.msra.mxu0 0.0
      %847 = vmatprep.subr.mxu0 0.0
      %848 = vmatpush1.msra.mxu0 0.0
      %849 = vmatprep.subr.mxu0 0.0
      %850 = vmatpush1.msra.mxu0 0.0
      %851 = vmatprep.subr.mxu0 0.0
      %852 = vmatpush1.msra.mxu0 0.0
      %853 = vmatprep.subr.mxu0 0.0
      %854 = vmatpush1.msra.mxu0 0.0
      %855 = vmatprep.subr.mxu0 0.0
      %856 = vmatpush1.msra.mxu0 0.0
      %857 = vmatprep.subr.mxu0 0.0
      %858 = vmatpush1.msra.mxu0 0.0
      %859 = vmatprep.subr.mxu0 0.0
      %860 = vmatpush1.msra.mxu0 0.0
      %861 = vmatprep.subr.mxu0 0.0
      %862 = vmatpush1.msra.mxu0 0.0
      %863 = vmatprep.subr.mxu0 0.0
      %864 = vmatpush1.msra.mxu0 0.0
      %865 = vmatprep.mubr.f32.mxu0 0.0
      %866 = vmatmul.mubr.f32.gmra.mrb[0].mxu0 %v790
      %v867 = vpop.f32.mrb[0].mxu0
      %v868 = vadd.f32 %v771, %v867
      %v869 = vpop.f32.mrb[0].mxu0
      %870 = vmatprep.mubr.f32.mxu0 0.0
      %871 = vmatmul.mubr.f32.gmra.mrb[0].mxu0 %v793
      %v872 = vpop.f32.mrb[0].mxu0
      %v873 = vadd.f32 %v776, %v872
      %v874 = vpop.f32.mrb[0].mxu0
      %875 = vmatprep.mubr.f32.mxu0 0.0
      %876 = vmatmul.mubr.f32.gmra.mrb[0].mxu0 %v796
      %v877 = vpop.f32.mrb[0].mxu0
      %v878 = vadd.f32 %v781, %v877
      %v879 = vpop.f32.mrb[0].mxu0
      %880 = vmatprep.mubr.f32.mxu0 0.0
      %881 = vmatmul.mubr.f32.gmra.mrb[0].mxu0 %v799
      %v882 = vpop.f32.mrb[0].mxu0
      %v883 = vadd.f32 %v786, %v882
      %v884 = vpop.f32.mrb[0].mxu0
      %885 = vdwg.mxu0
      %v886 = vld [vmem:[%s6] sm:$0xff]
      %v887 = vld [vmem:[%s6 + $0x8] sm:$0xff]
      %v888 = vld [vmem:[%s6 + $0x10] sm:$0xff]
      %v889 = vld [vmem:[%s6 + $0x18] sm:$0xff]
      %v890 = vld [vmem:[%s6 + $0x20] sm:$0xff]
      %v891 = vld [vmem:[%s6 + $0x28] sm:$0xff]
      %v892 = vld [vmem:[%s6 + $0x30] sm:$0xff]
      %v893 = vld [vmem:[%s6 + $0x38] sm:$0xff]
      %v894 = vld [vmem:[%s6 + $0x40] sm:$0xff]
      %v895 = vld [vmem:[%s6 + $0x48] sm:$0xff]
      %v896 = vld [vmem:[%s6 + $0x50] sm:$0xff]
      %v897 = vld [vmem:[%s6 + $0x58] sm:$0xff]
      %v898 = vld [vmem:[%s7] sm:$0xff]
      %v899 = vld [vmem:[%s7 + $0x8] sm:$0xff]
      %v900 = vld [vmem:[%s7 + $0x10] sm:$0xff]
      %v901 = vld [vmem:[%s7 + $0x18] sm:$0xff]
      %v902 = vld [vmem:[%s7 + $0x20] sm:$0xff]
      %v903 = vld [vmem:[%s7 + $0x28] sm:$0xff]
      %v904 = vld [vmem:[%s7 + $0x30] sm:$0xff]
      %v905 = vld [vmem:[%s7 + $0x38] sm:$0xff]
      %v906 = vld [vmem:[%s7 + $0x40] sm:$0xff]
      %v907 = vld [vmem:[%s7 + $0x48] sm:$0xff]
      %v908 = vld [vmem:[%s7 + $0x50] sm:$0xff]
      %v909 = vld [vmem:[%s7 + $0x58] sm:$0xff]
      %911 = vset.pattern.permute.xlu0 0
      %912 = vperm.xlu0 %911, %v898
      %v913 = vpop.permute.xlu0 %912
      %916 = vset.pattern.permute.xlu0 0
      %917 = vperm.xlu0 %916, %v899
      %v918 = vpop.permute.xlu0 %917
      %921 = vset.pattern.permute.xlu0 0
      %922 = vperm.xlu0 %921, %v900
      %v923 = vpop.permute.xlu0 %922
      %926 = vset.pattern.permute.xlu0 0
      %927 = vperm.xlu0 %926, %v901
      %v928 = vpop.permute.xlu0 %927
      %931 = vset.pattern.permute.xlu0 0
      %932 = vperm.xlu0 %931, %v902
      %v933 = vpop.permute.xlu0 %932
      %936 = vset.pattern.permute.xlu0 0
      %937 = vperm.xlu0 %936, %v903
      %v938 = vpop.permute.xlu0 %937
      %941 = vset.pattern.permute.xlu0 0
      %942 = vperm.xlu0 %941, %v904
      %v943 = vpop.permute.xlu0 %942
      %946 = vset.pattern.permute.xlu0 0
      %947 = vperm.xlu0 %946, %v905
      %v948 = vpop.permute.xlu0 %947
      %951 = vset.pattern.permute.xlu0 0
      %952 = vperm.xlu0 %951, %v906
      %v953 = vpop.permute.xlu0 %952
      %956 = vset.pattern.permute.xlu0 0
      %957 = vperm.xlu0 %956, %v907
      %v958 = vpop.permute.xlu0 %957
      %961 = vset.pattern.permute.xlu0 0
      %962 = vperm.xlu0 %961, %v908
      %v963 = vpop.permute.xlu0 %962
      %966 = vset.pattern.permute.xlu0 0
      %967 = vperm.xlu0 %966, %v909
      %v968 = vpop.permute.xlu0 %967
      %vm970 = vcmask 261120
      %v972 = vsel %vm970, %v886, 0
      %v975 = vsel %vm970, %v887, 0
      %v978 = vsel %vm970, %v888, 0
      %v981 = vsel %vm970, %v889, 0
      %v984 = vsel %vm970, %v890, 0
      %v987 = vsel %vm970, %v891, 0
      %v990 = vsel %vm970, %v892, 0
      %v993 = vsel %vm970, %v893, 0
      %v996 = vsel %vm970, %v894, 0
      %v999 = vsel %vm970, %v895, 0
      %v1002 = vsel %vm970, %v896, 0
      %v1005 = vsel %vm970, %v897, 0
      %1007 = vmatprep.subr.mxu0 0.0
      %1008 = vmatpush1.msra.mxu0 %v868
      %1009 = vmatprep.subr.mxu0 0.0
      %1010 = vmatpush1.msra.mxu0 %v873
      %1011 = vmatprep.subr.mxu0 0.0
      %1012 = vmatpush1.msra.mxu0 %v878
      %1013 = vmatprep.subr.mxu0 0.0
      %1014 = vmatpush1.msra.mxu0 %v883
      %1015 = vmatprep.subr.mxu0 0.0
      %1016 = vmatpush1.msra.mxu0 0.0
      %1017 = vmatprep.subr.mxu0 0.0
      %1018 = vmatpush1.msra.mxu0 0.0
      %1019 = vmatprep.subr.mxu0 0.0
      %1020 = vmatpush1.msra.mxu0 0.0
      %1021 = vmatprep.subr.mxu0 0.0
      %1022 = vmatpush1.msra.mxu0 0.0
      %1023 = vmatprep.subr.mxu0 0.0
      %1024 = vmatpush1.msra.mxu0 0.0
      %1025 = vmatprep.subr.mxu0 0.0
      %1026 = vmatpush1.msra.mxu0 0.0
      %1027 = vmatprep.subr.mxu0 0.0
      %1028 = vmatpush1.msra.mxu0 0.0
      %1029 = vmatprep.subr.mxu0 0.0
      %1030 = vmatpush1.msra.mxu0 0.0
      %1031 = vmatprep.subr.mxu0 0.0
      %1032 = vmatpush1.msra.mxu0 0.0
      %1033 = vmatprep.subr.mxu0 0.0
      %1034 = vmatpush1.msra.mxu0 0.0
      %1035 = vmatprep.subr.mxu0 0.0
      %1036 = vmatpush1.msra.mxu0 0.0
      %1037 = vmatprep.subr.mxu0 0.0
      %1038 = vmatpush1.msra.mxu0 0.0
      %1039 = vmatprep.subr.mxu0 0.0
      %1040 = vmatpush1.msra.mxu0 0.0
      %1041 = vmatprep.subr.mxu0 0.0
      %1042 = vmatpush1.msra.mxu0 0.0
      %1043 = vmatprep.subr.mxu0 0.0
      %1044 = vmatpush1.msra.mxu0 0.0
      %1045 = vmatprep.subr.mxu0 0.0
      %1046 = vmatpush1.msra.mxu0 0.0
      %1047 = vmatprep.subr.mxu0 0.0
      %1048 = vmatpush1.msra.mxu0 0.0
      %1049 = vmatprep.subr.mxu0 0.0
      %1050 = vmatpush1.msra.mxu0 0.0
      %1051 = vmatprep.subr.mxu0 0.0
      %1052 = vmatpush1.msra.mxu0 0.0
      %1053 = vmatprep.subr.mxu0 0.0
      %1054 = vmatpush1.msra.mxu0 0.0
      %1055 = vmatprep.subr.mxu0 0.0
      %1056 = vmatpush1.msra.mxu0 0.0
      %1057 = vmatprep.subr.mxu0 0.0
      %1058 = vmatpush1.msra.mxu0 0.0
      %1059 = vmatprep.subr.mxu0 0.0
      %1060 = vmatpush1.msra.mxu0 0.0
      %1061 = vmatprep.subr.mxu0 0.0
      %1062 = vmatpush1.msra.mxu0 0.0
      %1063 = vmatprep.subr.mxu0 0.0
      %1064 = vmatpush1.msra.mxu0 0.0
      %1065 = vmatprep.subr.mxu0 0.0
      %1066 = vmatpush1.msra.mxu0 0.0
      %1067 = vmatprep.subr.mxu0 0.0
      %1068 = vmatpush1.msra.mxu0 0.0
      %1069 = vmatprep.subr.mxu0 0.0
      %1070 = vmatpush1.msra.mxu0 0.0
      %1071 = vmatprep.mubr.f32.mxu0 0.0
      %1072 = vmatmul.mubr.f32.gmra.mrb[0].mxu0 %v972
      %v1073 = vpop.f32.mrb[0].mxu0
      %v1074 = vadd.f32 %v913, %v1073
      %v1075 = vpop.f32.mrb[0].mxu0
      %1076 = vmatprep.mubr.f32.mxu0 0.0
      %1077 = vmatmul.mubr.f32.gmra.mrb[0].mxu0 %v975
      %v1078 = vpop.f32.mrb[0].mxu0
      %v1079 = vadd.f32 %v918, %v1078
      %v1080 = vpop.f32.mrb[0].mxu0
      %1081 = vmatprep.mubr.f32.mxu0 0.0
      %1082 = vmatmul.mubr.f32.gmra.mrb[0].mxu0 %v978
      %v1083 = vpop.f32.mrb[0].mxu0
      %v1084 = vadd.f32 %v923, %v1083
      %v1085 = vpop.f32.mrb[0].mxu0
      %1086 = vmatprep.mubr.f32.mxu0 0.0
      %1087 = vmatmul.mubr.f32.gmra.mrb[0].mxu0 %v981
      %v1088 = vpop.f32.mrb[0].mxu0
      %v1089 = vadd.f32 %v928, %v1088
      %v1090 = vpop.f32.mrb[0].mxu0
      %1091 = vmatprep.mubr.f32.mxu0 0.0
      %1092 = vmatmul.mubr.f32.gmra.mrb[0].mxu0 %v984
      %v1093 = vpop.f32.mrb[0].mxu0
      %v1094 = vadd.f32 %v933, %v1093
      %v1095 = vpop.f32.mrb[0].mxu0
      %1096 = vmatprep.mubr.f32.mxu0 0.0
      %1097 = vmatmul.mubr.f32.gmra.mrb[0].mxu0 %v987
      %v1098 = vpop.f32.mrb[0].mxu0
      %v1099 = vadd.f32 %v938, %v1098
      %v1100 = vpop.f32.mrb[0].mxu0
      %1101 = vmatprep.mubr.f32.mxu0 0.0
      %1102 = vmatmul.mubr.f32.gmra.mrb[0].mxu0 %v990
      %v1103 = vpop.f32.mrb[0].mxu0
      %v1104 = vadd.f32 %v943, %v1103
      %v1105 = vpop.f32.mrb[0].mxu0
      %1106 = vmatprep.mubr.f32.mxu0 0.0
      %1107 = vmatmul.mubr.f32.gmra.mrb[0].mxu0 %v993
      %v1108 = vpop.f32.mrb[0].mxu0
      %v1109 = vadd.f32 %v948, %v1108
      %v1110 = vpop.f32.mrb[0].mxu0
      %1111 = vmatprep.mubr.f32.mxu0 0.0
      %1112 = vmatmul.mubr.f32.gmra.mrb[0].mxu0 %v996
      %v1113 = vpop.f32.mrb[0].mxu0
      %v1114 = vadd.f32 %v953, %v1113
      %v1115 = vpop.f32.mrb[0].mxu0
      %1116 = vmatprep.mubr.f32.mxu0 0.0
      %1117 = vmatmul.mubr.f32.gmra.mrb[0].mxu0 %v999
      %v1118 = vpop.f32.mrb[0].mxu0
      %v1119 = vadd.f32 %v958, %v1118
      %v1120 = vpop.f32.mrb[0].mxu0
      %1121 = vmatprep.mubr.f32.mxu0 0.0
      %1122 = vmatmul.mubr.f32.gmra.mrb[0].mxu0 %v1002
      %v1123 = vpop.f32.mrb[0].mxu0
      %v1124 = vadd.f32 %v963, %v1123
      %v1125 = vpop.f32.mrb[0].mxu0
      %1126 = vmatprep.mubr.f32.mxu0 0.0
      %1127 = vmatmul.mubr.f32.gmra.mrb[0].mxu0 %v1005
      %v1128 = vpop.f32.mrb[0].mxu0
      %v1129 = vadd.f32 %v968, %v1128
      %v1130 = vpop.f32.mrb[0].mxu0
      %1131 = vdwg.mxu0
      %vm1132 = vcmask 15360
      %1133 = vst.msk [vmem:[%s305] sm:$0xff] %vm1132, %v1074
      %1134 = vst.msk [vmem:[%s305 + $0x8] sm:$0xff] %vm1132, %v1079
      %1135 = vst.msk [vmem:[%s305 + $0x10] sm:$0xff] %vm1132, %v1084
      %1136 = vst.msk [vmem:[%s305 + $0x18] sm:$0xff] %vm1132, %v1089
      %1137 = vst.msk [vmem:[%s305 + $0x20] sm:$0xff] %vm1132, %v1094
      %1138 = vst.msk [vmem:[%s305 + $0x28] sm:$0xff] %vm1132, %v1099
      %1139 = vst.msk [vmem:[%s305 + $0x30] sm:$0xff] %vm1132, %v1104
      %1140 = vst.msk [vmem:[%s305 + $0x38] sm:$0xff] %vm1132, %v1109
      %1141 = vst.msk [vmem:[%s305 + $0x40] sm:$0xff] %vm1132, %v1114
      %1142 = vst.msk [vmem:[%s305 + $0x48] sm:$0xff] %vm1132, %v1119
      %1143 = vst.msk [vmem:[%s305 + $0x50] sm:$0xff] %vm1132, %v1124
      %1144 = vst.msk [vmem:[%s305 + $0x58] sm:$0xff] %vm1132, %v1129
      %p1145 = scmp.lt.s32.totalorder %s19, 7
      %s1146 = scalar_select %p1145, %s19, 7
      %s1147 = smul.addr %s1146, 12
      %s1148 = smul.addr %s1147, 8
      %s1149 = scalar_lea.vmem %s8, %s1148
      // Predicated region
      $region53: #{convrnn_forward.2} parent=51 // pred_check
        %p1150 = pneg %p210
      $region54: #{convrnn_forward.2} parent=51 // pred_check_branch
        %1152 = sbr.rel (%p1150) target = $region56
      $region55: #{convrnn_forward.2} parent=51 // pred_region
        _
      $region56: #{convrnn_forward.2} parent=51 // pred_fallthru
        _
    $region52: #{convrnn_forward.2} parent=5 // pred_fallthru
      _
    %p1153 = scmp.le.s32.totalorder 2, %s14
    // Predicated region
    $region57: #{convrnn_forward.2} parent=5 // pred_check
      %p1154 = pneg %p1153
    $region58: #{convrnn_forward.2} parent=5 // pred_check_branch
      %1156 = sbr.rel (%p1154) target = $region60
    $region59: #{convrnn_forward.2} parent=5 // pred_region
      %s1157 = ssub.s32 %s14, 2
      // Predicated region
      $region61: #{convrnn_forward.2} parent=59 // pred_check
        %p1158 = pneg %p216
      $region62: #{convrnn_forward.2} parent=59 // pred_check_branch
        %1160 = sbr.rel (%p1158) target = $region64
      $region63: #{convrnn_forward.2} parent=59 // pred_region
        %p1161 = scmp.lt.s32.totalorder %s20, 7
        %s1162 = scalar_select %p1161, %s20, 7
        %s1163 = smul.addr %s1162, 12
        %s1164 = smul.addr %s1163, 8
        %s1165 = scalar_lea.vmem %s8, %s1164
      $region64: #{convrnn_forward.2} parent=59 // pred_fallthru
        _
    $region60: #{convrnn_forward.2} parent=5 // pred_fallthru
      _
  $region6: #{convrnn_forward.2} parent=0 // loop_footer
    %s18 = sadd.s32 1, %s14
  $region7: #{convrnn_forward.2} parent=0 // loop_footer_branch
    %13 = sbr.rel target = $region3
  $region8: #{convrnn_forward.2} parent=0 // loop_exit
    _

</llo_original>
